<compile_context>
chip_gen: v6e
topology: v6e:2x2x1
jax: 0.10.0
libtpu: 0.0.40
codegen_flags: <defaults>
</compile_context>

<pallas_src>
import numpy as np
import jax
import jax.numpy as jnp
from jax.experimental import pallas as pl
from jax.experimental.pallas import tpu as pltpu


def _round_up(x, m):
    return ((x + m - 1) // m) * m


def _choose_tile_m(M):
    """Row-tile selection.

    * small problems -> one grid step (no pipeline / per-step overhead)
    * otherwise the largest 256-multiple tile that divides M exactly,
      avoiding tiny odd grids (v7x dual-TC load balance with "parallel"
      dimension semantics); fall back to 512 with row padding.
    """
    if M <= 1024:
        return _round_up(max(M, 16), 16)
    for t in (1024, 512, 256):
        if M % t == 0:
            g = M // t
            if g >= 8 or g % 2 == 0:   # even grid only matters when grid is tiny
                return t
    for t in (1024, 512, 256):
        if M % t == 0:
            return t
    return 512


# ----------------------------- Pallas kernel ------------------------------ #
def _patch_embed_kernel(x_ref, w_ref, b_ref, o_ref):
    # x_ref: (tm, K) bf16   w_ref: (K, E) bf16   b_ref: (1, E) f32
    # o_ref: (tm, E) out_dtype  (f32 accumulation, f32 bias add, single cast)
    acc = jnp.dot(x_ref[...], w_ref[...], preferred_element_type=jnp.float32)
    o_ref[...] = (acc + b_ref[...]).astype(o_ref.dtype)


def patch_embed_matmul(x_mat, w_mat, bias, *, out_dtype=jnp.float32):
    """x_mat: [M, K], w_mat: [K, E], bias: [1, E] -> [M, E] in out_dtype."""
    M, K = x_mat.shape
    Kw, E = w_mat.shape
    assert Kw == K and bias.shape == (1, E)

    # Dense MXU feed: pad K to a lane multiple on BOTH operands (bias untouched).
    # No-op for the production K=1536 and when the weight was pre-padded.
    K_pad = _round_up(K, 128)
    if K_pad != K:
        x_mat = jnp.pad(x_mat, ((0, 0), (0, K_pad - K)))
        w_mat = jnp.pad(w_mat, ((0, K_pad - K), (0, 0)))

    # Lane-dense output: pad E to a multiple of 128 (avoids masked vst stores).
    E_pad = _round_up(E, 128)
    if E_pad != E:
        w_mat = jnp.pad(w_mat, ((0, 0), (0, E_pad - E)))
        bias = jnp.pad(bias, ((0, 0), (0, E_pad - E)))

    tile_m = _choose_tile_m(M)
    M_pad = _round_up(M, tile_m)
    if M_pad != M:
        x_mat = jnp.pad(x_mat, ((0, M_pad - M), (0, 0)))
    grid_m = M_pad // tile_m

    # VMEM budget from the actual buffer arithmetic (weight/bias are constant
    # across the grid but default pipelining still allocates two buffers).
    x_bytes = x_mat.dtype.itemsize
    w_bytes = w_mat.dtype.itemsize
    o_bytes = np.dtype(out_dtype).itemsize
    vmem_need = (2 * tile_m * K_pad * x_bytes        # x tile, double-buffered
                 + 2 * tile_m * E_pad * o_bytes      # out tile, double-buffered
                 + 2 * K_pad * E_pad * w_bytes       # weight
                 + 2 * E_pad * 4)                    # bias
    vmem_limit = min(max(int(vmem_need * 1.25) + (4 << 20), 16 << 20), 100 << 20)

    cost = pl.CostEstimate(
        flops=2 * M_pad * K_pad * E_pad,
        transcendentals=0,
        bytes_accessed=(x_mat.size * x_bytes
                        + w_mat.size * w_bytes
                        + bias.size * bias.dtype.itemsize
                        + M_pad * E_pad * o_bytes),
    )

    out = pl.pallas_call(
        _patch_embed_kernel,
        out_shape=jax.ShapeDtypeStruct((M_pad, E_pad), out_dtype),
        grid_spec=pltpu.PrefetchScalarGridSpec(
            num_scalar_prefetch=0,
            grid=(grid_m,),
            in_specs=[
                pl.BlockSpec((tile_m, K_pad), lambda i: (i, 0)),  # patch-row tile
                pl.BlockSpec((K_pad, E_pad), lambda i: (0, 0)),   # weight (VMEM-resident)
                pl.BlockSpec((1, E_pad), lambda i: (0, 0)),       # bias
            ],
            out_specs=pl.BlockSpec((tile_m, E_pad), lambda i: (i, 0)),
        ),
        compiler_params=pltpu.CompilerParams(
            dimension_semantics=("parallel",),          # shard M across TCs (v7x)
            allow_input_fusion=[True, False, False],    # fuse patchify into x DMA
            vmem_limit_bytes=vmem_limit,
        ),
        cost_estimate=cost,
    )(x_mat, w_mat, bias)

    if M_pad != M or E_pad != E:
        out = out[:M, :E]
    return out


# --------------------------- Module equivalent ----------------------------- #
class PatchEmbed3D:
    """JAX/Pallas equivalent of the PyTorch PatchEmbed3D module."""

    def __init__(self, patch_size=16, tubelet_size=2, in_chans=3,
                 embed_dim=768, key=None, compute_dtype=jnp.bfloat16,
                 out_dtype=jnp.float32):
        self.patch_size = patch_size
        self.tubelet_size = tubelet_size
        self.in_chans = in_chans
        self.embed_dim = embed_dim
        self.compute_dtype = compute_dtype
        self.out_dtype = out_dtype
        if key is None:
            key = jax.random.PRNGKey(0)
        kw, kb = jax.random.split(key)
        K = in_chans * tubelet_size * patch_size * patch_size
        self.K = K
        self.K_pad = _round_up(K, 128)
        bound = 1.0 / float(np.sqrt(K))
        # Conv3d weight layout: (embed_dim, in_chans, tubelet, patch, patch)
        self.weight = jax.random.uniform(
            kw, (embed_dim, in_chans, tubelet_size, patch_size, patch_size),
            minval=-bound, maxval=bound, dtype=jnp.float32)
        self.bias = jax.random.uniform(
            kb, (embed_dim,), minval=-bound, maxval=bound, dtype=jnp.float32)
        # Precompute the matmul layouts ONCE: (K_pad, E) bf16 weight (zero-padded
        # on K so the per-call pad is a no-op) and (1, E) f32 bias.
        w_mat = jnp.asarray(self.weight.reshape(embed_dim, K).T, dtype=compute_dtype)
        if self.K_pad != K:
            w_mat = jnp.pad(w_mat, ((0, self.K_pad - K), (0, 0)))
        self.w_mat = w_mat
        self.b_mat = self.bias.reshape(1, embed_dim).astype(jnp.float32)

    def __call__(self, x):
        # x: [B, C, T, H, W]  (same NCTHW convention as the PyTorch module)
        B, C, T, H, W = x.shape
        ts, ps, E = self.tubelet_size, self.patch_size, self.embed_dim
        assert C == self.in_chans and T % ts == 0 and H % ps == 0 and W % ps == 0
        Tp, Hp, Wp = T // ts, H // ps, W // ps
        N = Tp * Hp * Wp
        K = C * ts * ps * ps

        # Cast to the compute dtype FIRST so the patchify transpose / x_mat
        # intermediate carries bf16 bytes even if input fusion is declined.
        x = x.astype(self.compute_dtype)
        # Patchify: [B,C,T,H,W] -> [B,Tp,Hp,Wp,C,ts,ps,ps] -> [B*N, K(_pad)].
        xp = x.reshape(B, C, Tp, ts, Hp, ps, Wp, ps)
        xp = jnp.transpose(xp, (0, 2, 4, 6, 1, 3, 5, 7))
        x_mat = xp.reshape(B * N, K)
        if self.K_pad != K:                       # match the pre-padded weight
            x_mat = jnp.pad(x_mat, ((0, 0), (0, self.K_pad - K)))

        out = patch_embed_matmul(x_mat, self.w_mat, self.b_mat,
                                 out_dtype=self.out_dtype)
        return out.reshape(B, N, E)   # == proj(x).flatten(2).transpose(1,2)


# --------------------------------- Main ------------------------------------ #
if __name__ == "__main__":
    key = jax.random.PRNGKey(0)
    k_in, k_params = jax.random.split(key)

    # Small shapes consistent with the module's forward:
    #   B=2, C=3, T=8, H=W=32, patch=4, tubelet=2, embed_dim=128
    #   -> N = 4*8*8 = 256 patches/sample, M = 512 rows (single grid step),
    #      K = 3*2*4*4 = 96 -> padded to 128, E = 128 (lane-aligned).
    B, C, T, H, W = 2, 3, 8, 32, 32
    patch_size, tubelet_size, embed_dim = 4, 2, 128

    x = jax.random.normal(k_in, (B, C, T, H, W), dtype=jnp.float32)

    mod = PatchEmbed3D(patch_size=patch_size, tubelet_size=tubelet_size,
                       in_chans=C, embed_dim=embed_dim, key=k_params)

    fwd = jax.jit(mod.__call__)
    out = jax.block_until_ready(fwd(x))

    # References: pure-JAX patchify + matmul (same semantics as Conv3d proj).
    Tp, Hp, Wp = T // tubelet_size, H // patch_size, W // patch_size
    N = Tp * Hp * Wp
    Kdim = C * tubelet_size * patch_size * patch_size
    xp = x.reshape(B, C, Tp, tubelet_size, Hp, patch_size, Wp, patch_size)
    xp = jnp.transpose(xp, (0, 2, 4, 6, 1, 3, 5, 7)).reshape(B * N, Kdim)

    # (a) full-f32 reference: loose tolerance because kernel uses bf16 inputs.
    ref_f32 = (xp @ mod.weight.reshape(embed_dim, Kdim).T + mod.bias
               ).reshape(B, N, embed_dim)
    # (b) bf16-rounded-input reference with f32 accumulation: tight tolerance.
    w_bf16 = mod.weight.reshape(embed_dim, Kdim).T.astype(jnp.bfloat16
                                                          ).astype(jnp.float32)
    ref_bf16 = (xp.astype(jnp.bfloat16).astype(jnp.float32) @ w_bf16 + mod.bias
                ).reshape(B, N, embed_dim)

    assert out.shape == (B, N, embed_dim)
    assert out.dtype == jnp.float32
    assert jnp.allclose(out, ref_f32, atol=5e-2, rtol=5e-2), (
        "f32-ref mismatch, max abs err = %e" % float(jnp.max(jnp.abs(out - ref_f32))))
    assert jnp.allclose(out, ref_bf16, atol=1e-3, rtol=1e-3), (
        "bf16-ref mismatch, max abs err = %e" % float(jnp.max(jnp.abs(out - ref_bf16))))

    # Optional bf16-output path (mem-bound v6e): f32 accumulation + bias add,
    # only the final store is bf16 -> loose tolerance for the store rounding.
    mod_bf16 = PatchEmbed3D(patch_size=patch_size, tubelet_size=tubelet_size,
                            in_chans=C, embed_dim=embed_dim, key=k_params,
                            out_dtype=jnp.bfloat16)
    out_bf16 = jax.block_until_ready(jax.jit(mod_bf16.__call__)(x))
    assert out_bf16.dtype == jnp.bfloat16
    assert jnp.allclose(out_bf16.astype(jnp.float32), ref_bf16,
                        atol=3e-2, rtol=3e-2), "bf16-output mismatch"

    print("KERNEL_OK")
</pallas_src>

<mosaic_0001>
module attributes {stable_mosaic.version = 11 : i64} {
  func.func @_patch_embed_kernel(%arg0: i32, %arg1: memref<512x128xbf16, #tpu.memory_space<vmem>>, %arg2: memref<128x128xbf16, #tpu.memory_space<vmem>>, %arg3: memref<1x128xf32, #tpu.memory_space<vmem>>, %arg4: memref<512x128xf32, #tpu.memory_space<vmem>>) attributes {dimension_semantics = [#tpu.dimension_semantics<parallel>], iteration_bounds = array<i64: 1>, scalar_prefetch = 0 : i64, scratch_operands = 0 : i64, tpu.core_type = #tpu.core_type<tc>, window_params = [{transform_indices = @transform_0, window_bounds = array<i64: 512, 128>}, {pipeline_mode = #tpu.pipeline_mode<synchronous>, transform_indices = @transform_1, window_bounds = array<i64: 128, 128>}, {pipeline_mode = #tpu.pipeline_mode<synchronous>, transform_indices = @transform_2, window_bounds = array<i64: 1, 128>}, {transform_indices = @transform_3, window_bounds = array<i64: 512, 128>}]} {
    %c0 = arith.constant 0 : index
    %c0_0 = arith.constant 0 : index
    %0 = vector.load %arg1[%c0, %c0_0] : memref<512x128xbf16, #tpu.memory_space<vmem>>, vector<512x128xbf16>
    %c0_1 = arith.constant 0 : index
    %c0_2 = arith.constant 0 : index
    %1 = vector.load %arg2[%c0_1, %c0_2] : memref<128x128xbf16, #tpu.memory_space<vmem>>, vector<128x128xbf16>
    %cst = arith.constant dense<0.000000e+00> : vector<512x128xf32>
    %2 = tpu.matmul %0, %1, %cst {dimension_numbers = #tpu.dot_dimension_numbers<[1], [0], [0], [1], [0, 0, 1, 1], [], []>} : vector<512x128xbf16>, vector<128x128xbf16>, vector<512x128xf32> -> vector<512x128xf32>
    %c0_3 = arith.constant 0 : index
    %c0_4 = arith.constant 0 : index
    %3 = vector.load %arg3[%c0_3, %c0_4] : memref<1x128xf32, #tpu.memory_space<vmem>>, vector<1x128xf32>
    %4 = vector.broadcast %3 : vector<1x128xf32> to vector<512x128xf32>
    %5 = arith.addf %2, %4 : vector<512x128xf32>
    %c0_5 = arith.constant 0 : index
    %c0_6 = arith.constant 0 : index
    %6 = vector.load %arg4[%c0_5, %c0_6] : memref<512x128xf32, #tpu.memory_space<vmem>>, vector<512x128xf32>
    tpu.vector_store %arg4[%c0_5, %c0_6], %5 {strides = array<i32>} : memref<512x128xf32, #tpu.memory_space<vmem>>, vector<512x128xf32>,
    return
  }
  func.func @transform_0(%arg0: i32) -> (i32, i32) {
    %c0_i32 = arith.constant 0 : i32
    %c0_i32_0 = arith.constant 0 : i32
    return %arg0, %c0_i32 : i32, i32
  }
  func.func @transform_1(%arg0: i32) -> (i32, i32) {
    %c0_i32 = arith.constant 0 : i32
    %c0_i32_0 = arith.constant 0 : i32
    %c0_i32_1 = arith.constant 0 : i32
    return %c0_i32, %c0_i32_0 : i32, i32
  }
  func.func @transform_2(%arg0: i32) -> (i32, i32) {
    %c0_i32 = arith.constant 0 : i32
    %c0_i32_0 = arith.constant 0 : i32
    %c0_i32_1 = arith.constant 0 : i32
    return %c0_i32, %c0_i32_0 : i32, i32
  }
  func.func @transform_3(%arg0: i32) -> (i32, i32) {
    %c0_i32 = arith.constant 0 : i32
    %c0_i32_0 = arith.constant 0 : i32
    return %arg0, %c0_i32 : i32, i32
  }
}

</mosaic_0001>

<llo_original>
// kernel: a_call__.2
$region0: #{a_call__.2}
  #allocation0 [shape = 'u32[]', space=smem, size = 0x4, offset = 0x4, fixed_abs, tag = 'smem constant byte address 0x4 - core index']
  #allocation1 [shape = 'u32[144,128]{1,0:T(1,128)}', space=vmem, size = 0x12000, scoped, tag = 'internal scratch']
  #allocation2 [shape = 'u32[2048]{0}', space=vmem, size = 0x2000, scoped, tag = 'scoped memory for a_call__.2']
  #allocation3 [shape = 'u32[2048]{0}', space=vmem, size = 0x2000, scoped, tag = 'scoped memory for a_call__.2']
  #allocation4 [shape = 'u32[2048]{0}', space=vmem, size = 0x2000, scoped, tag = 'scoped memory for a_call__.2']
  #allocation5 [shape = 'u32[2048]{0}', space=vmem, size = 0x2000, scoped, tag = 'scoped memory for a_call__.2']
  #allocation6 [shape = 'u32[2048]{0}', space=vmem, size = 0x2000, scoped, tag = 'scoped memory for a_call__.2']
  %s0 = inlined_call_operand.vmem [shape: bf16[128,128], index: 0, kind: input, shape index: {}]
  %s1 = inlined_call_operand.vmem [shape: f32[1,128], index: 1, kind: input, shape index: {}]
  %s2 = inlined_call_operand.vmem [shape: bf16[512,96], index: 2, kind: input, shape index: {}]
  %s3 = inlined_call_operand.<no memory space> [shape: bf16[], index: 3, kind: input, shape index: {}]
  %s4 = inlined_call_operand.hbm [shape: f32[512,128], index: 4, kind: output, shape index: {}]
  %s5 = sld [smem:[#allocation0]]
  $region22: #{a_call__.2} parent=0
    _
  %s7 = ssub.s32 1, %s5
  %s8 = scalar_select 0, %s7, %s5
  %v9 = vstv %s3
  %v10 = vunpack.i.l.bf16 %v9
  %v12 = vunpack.i.h.bf16 %v9
  $region1: #{a_call__.2} parent=0
    #allocation7 [shape = 'u8[262144]{0}', space=vmem, size = 0x40000, scoped, tag = 'output window, operand 0, single buffered']
    #allocation8 [shape = 's32[1]{0}', space=sflag, size = 0x4, scoped, tag = 'scoped memory for a_call__.2']
    #allocation9 [shape = 'u8[131072]{0}', space=vmem, size = 0x20000, dematerialized = true, scoped, tag = 'FusionAdapter Buffer %fusion.1 = bf16[512,128]{1,0:T(8,128)(2,1)} fusion(%param_2.1, %param_3), kind=kLoop, calls=%fused_computation.1.clone, metadata={op_name="jit(__call__)/jit(_pad)/pad" stack_frame_id=11}']
    %14 = vsyncpa [#allocation8], 0
    // Predicated region
    $region2: #{a_call__.2} parent=1 // pred_check
      _
    $region3: #{a_call__.2} parent=1 // pred_check_branch
      %16 = sbr.rel (0) target = $region5
    $region4: #{a_call__.2} parent=1 // pred_region
      _
    $region5: #{a_call__.2} parent=1 // pred_fallthru
      _
    // Predicated region
    $region6: #{a_call__.2} parent=1 // pred_check
      _
    $region7: #{a_call__.2} parent=1 // pred_check_branch
      %18 = sbr.rel (0) target = $region9
    $region8: #{a_call__.2} parent=1 // pred_region
      _
    $region9: #{a_call__.2} parent=1 // pred_fallthru
      _
    // Predicated region
    $region10: #{a_call__.2} parent=1 // pred_check
      _
    $region11: #{a_call__.2} parent=1 // pred_check_branch
      %20 = sbr.rel (0) target = $region13
    $region12: #{a_call__.2} parent=1 // pred_region
      _
    $region13: #{a_call__.2} parent=1 // pred_fallthru
      _
    %s22 = sor.u32 255, 127
    %s23 = sand.u32 %s22, 85
    %s24 = sshrl.u32 %s23, 1
    %s25 = sor.u32 %s23, %s24
    %s26 = sand.u32 51, %s25
    %s27 = sshrl.u32 %s26, 2
    %s28 = sor.u32 %s26, %s27
    %s29 = sand.u32 15, %s28
    %v30 = vld [vmem:[%s2] sm:%s29]
    %v31 = vunpack.c.l.bf16 %v30
    %v32 = vunpack.c.h.bf16 %v30
    %v33 = vlaneseq
    %v34 = vand.u32 %v33, 127
    %vm36 = vcmp.lt.s32.totalorder %v34, 96
    %v37 = vsel %vm36, %v31, %v10
    %v38 = vpack.c.bf16 0.0, %v37
    %s40 = ssub.s32 16, 1
    %41 = vst [vmem:[#allocation9] sm:%s40] %v38
    %s42 = scalar_lea.vmem %s2, 4
    %s44 = sor.u32 255, 127
    %s45 = sand.u32 %s44, 85
    %s46 = sshrl.u32 %s45, 1
    %s47 = sor.u32 %s45, %s46
    %s48 = sand.u32 51, %s47
    %s49 = sshrl.u32 %s48, 2
    %s50 = sor.u32 %s48, %s49
    %s51 = sand.u32 15, %s50
    %v52 = vld [vmem:[%s42] sm:%s51]
    %v53 = vunpack.c.l.bf16 %v52
    %v54 = vunpack.c.h.bf16 %v52
    %v55 = vlaneseq
    %v56 = vand.u32 %v55, 127
    %vm58 = vcmp.lt.s32.totalorder %v56, 96
    %v59 = vsel %vm58, %v53, %v10
    %s60 = scalar_lea.vmem [#allocation9], 4
    %v61 = vpack.c.bf16 0.0, %v59
    %s63 = ssub.s32 16, 1
    %64 = vst [vmem:[%s60] sm:%s63] %v61
    %s65 = scalar_lea.vmem %s2, 8
    %s67 = sor.u32 255, 127
    %s68 = sand.u32 %s67, 85
    %s69 = sshrl.u32 %s68, 1
    %s70 = sor.u32 %s68, %s69
    %s71 = sand.u32 51, %s70
    %s72 = sshrl.u32 %s71, 2
    %s73 = sor.u32 %s71, %s72
    %s74 = sand.u32 15, %s73
    %v75 = vld [vmem:[%s65] sm:%s74]
    %v76 = vunpack.c.l.bf16 %v75
    %v77 = vunpack.c.h.bf16 %v75
    %v78 = vlaneseq
    %v79 = vand.u32 %v78, 127
    %vm81 = vcmp.lt.s32.totalorder %v79, 96
    %v82 = vsel %vm81, %v76, %v10
    %s83 = scalar_lea.vmem [#allocation9], 8
    %v84 = vpack.c.bf16 0.0, %v82
    %s86 = ssub.s32 16, 1
    %87 = vst [vmem:[%s83] sm:%s86] %v84
    %s88 = scalar_lea.vmem %s2, 12
    %s90 = sor.u32 255, 127
    %s91 = sand.u32 %s90, 85
    %s92 = sshrl.u32 %s91, 1
    %s93 = sor.u32 %s91, %s92
    %s94 = sand.u32 51, %s93
    %s95 = sshrl.u32 %s94, 2
    %s96 = sor.u32 %s94, %s95
    %s97 = sand.u32 15, %s96
    %v98 = vld [vmem:[%s88] sm:%s97]
    %v99 = vunpack.c.l.bf16 %v98
    %v100 = vunpack.c.h.bf16 %v98
    %v101 = vlaneseq
    %v102 = vand.u32 %v101, 127
    %vm104 = vcmp.lt.s32.totalorder %v102, 96
    %v105 = vsel %vm104, %v99, %v10
    %s106 = scalar_lea.vmem [#allocation9], 12
    %v107 = vpack.c.bf16 0.0, %v105
    %s109 = ssub.s32 16, 1
    %110 = vst [vmem:[%s106] sm:%s109] %v107
    %s111 = scalar_lea.vmem %s2, 16
    %s113 = sor.u32 255, 127
    %s114 = sand.u32 %s113, 85
    %s115 = sshrl.u32 %s114, 1
    %s116 = sor.u32 %s114, %s115
    %s117 = sand.u32 51, %s116
    %s118 = sshrl.u32 %s117, 2
    %s119 = sor.u32 %s117, %s118
    %s120 = sand.u32 15, %s119
    %v121 = vld [vmem:[%s111] sm:%s120]
    %v122 = vunpack.c.l.bf16 %v121
    %v123 = vunpack.c.h.bf16 %v121
    %v124 = vlaneseq
    %v125 = vand.u32 %v124, 127
    %vm127 = vcmp.lt.s32.totalorder %v125, 96
    %v128 = vsel %vm127, %v122, %v10
    %s129 = scalar_lea.vmem [#allocation9], 16
    %v130 = vpack.c.bf16 0.0, %v128
    %s132 = ssub.s32 16, 1
    %133 = vst [vmem:[%s129] sm:%s132] %v130
    %s134 = scalar_lea.vmem %s2, 20
    %s136 = sor.u32 255, 127
    %s137 = sand.u32 %s136, 85
    %s138 = sshrl.u32 %s137, 1
    %s139 = sor.u32 %s137, %s138
    %s140 = sand.u32 51, %s139
    %s141 = sshrl.u32 %s140, 2
    %s142 = sor.u32 %s140, %s141
    %s143 = sand.u32 15, %s142
    %v144 = vld [vmem:[%s134] sm:%s143]
    %v145 = vunpack.c.l.bf16 %v144
    %v146 = vunpack.c.h.bf16 %v144
    %v147 = vlaneseq
    %v148 = vand.u32 %v147, 127
    %vm150 = vcmp.lt.s32.totalorder %v148, 96
    %v151 = vsel %vm150, %v145, %v10
    %s152 = scalar_lea.vmem [#allocation9], 20
    %v153 = vpack.c.bf16 0.0, %v151
    %s155 = ssub.s32 16, 1
    %156 = vst [vmem:[%s152] sm:%s155] %v153
    %s157 = scalar_lea.vmem %s2, 24
    %s159 = sor.u32 255, 127
    %s160 = sand.u32 %s159, 85
    %s161 = sshrl.u32 %s160, 1
    %s162 = sor.u32 %s160, %s161
    %s163 = sand.u32 51, %s162
    %s164 = sshrl.u32 %s163, 2
    %s165 = sor.u32 %s163, %s164
    %s166 = sand.u32 15, %s165
    %v167 = vld [vmem:[%s157] sm:%s166]
    %v168 = vunpack.c.l.bf16 %v167
    %v169 = vunpack.c.h.bf16 %v167
    %v170 = vlaneseq
    %v171 = vand.u32 %v170, 127
    %vm173 = vcmp.lt.s32.totalorder %v171, 96
    %v174 = vsel %vm173, %v168, %v10
    %s175 = scalar_lea.vmem [#allocation9], 24
    %v176 = vpack.c.bf16 0.0, %v174
    %s178 = ssub.s32 16, 1
    %179 = vst [vmem:[%s175] sm:%s178] %v176
    %s180 = scalar_lea.vmem %s2, 28
    %s182 = sor.u32 255, 127
    %s183 = sand.u32 %s182, 85
    %s184 = sshrl.u32 %s183, 1
    %s185 = sor.u32 %s183, %s184
    %s186 = sand.u32 51, %s185
    %s187 = sshrl.u32 %s186, 2
    %s188 = sor.u32 %s186, %s187
    %s189 = sand.u32 15, %s188
    %v190 = vld [vmem:[%s180] sm:%s189]
    %v191 = vunpack.c.l.bf16 %v190
    %v192 = vunpack.c.h.bf16 %v190
    %v193 = vlaneseq
    %v194 = vand.u32 %v193, 127
    %vm196 = vcmp.lt.s32.totalorder %v194, 96
    %v197 = vsel %vm196, %v191, %v10
    %s198 = scalar_lea.vmem [#allocation9], 28
    %v199 = vpack.c.bf16 0.0, %v197
    %s201 = ssub.s32 16, 1
    %202 = vst [vmem:[%s198] sm:%s201] %v199
    %s203 = scalar_lea.vmem %s2, 32
    %s205 = sor.u32 255, 127
    %s206 = sand.u32 %s205, 85
    %s207 = sshrl.u32 %s206, 1
    %s208 = sor.u32 %s206, %s207
    %s209 = sand.u32 51, %s208
    %s210 = sshrl.u32 %s209, 2
    %s211 = sor.u32 %s209, %s210
    %s212 = sand.u32 15, %s211
    %v213 = vld [vmem:[%s203] sm:%s212]
    %v214 = vunpack.c.l.bf16 %v213
    %v215 = vunpack.c.h.bf16 %v213
    %v216 = vlaneseq
    %v217 = vand.u32 %v216, 127
    %vm219 = vcmp.lt.s32.totalorder %v217, 96
    %v220 = vsel %vm219, %v214, %v10
    %s221 = scalar_lea.vmem [#allocation9], 32
    %v222 = vpack.c.bf16 0.0, %v220
    %s224 = ssub.s32 16, 1
    %225 = vst [vmem:[%s221] sm:%s224] %v222
    %s226 = scalar_lea.vmem %s2, 36
    %s228 = sor.u32 255, 127
    %s229 = sand.u32 %s228, 85
    %s230 = sshrl.u32 %s229, 1
    %s231 = sor.u32 %s229, %s230
    %s232 = sand.u32 51, %s231
    %s233 = sshrl.u32 %s232, 2
    %s234 = sor.u32 %s232, %s233
    %s235 = sand.u32 15, %s234
    %v236 = vld [vmem:[%s226] sm:%s235]
    %v237 = vunpack.c.l.bf16 %v236
    %v238 = vunpack.c.h.bf16 %v236
    %v239 = vlaneseq
    %v240 = vand.u32 %v239, 127
    %vm242 = vcmp.lt.s32.totalorder %v240, 96
    %v243 = vsel %vm242, %v237, %v10
    %s244 = scalar_lea.vmem [#allocation9], 36
    %v245 = vpack.c.bf16 0.0, %v243
    %s247 = ssub.s32 16, 1
    %248 = vst [vmem:[%s244] sm:%s247] %v245
    %s249 = scalar_lea.vmem %s2, 40
    %s251 = sor.u32 255, 127
    %s252 = sand.u32 %s251, 85
    %s253 = sshrl.u32 %s252, 1
    %s254 = sor.u32 %s252, %s253
    %s255 = sand.u32 51, %s254
    %s256 = sshrl.u32 %s255, 2
    %s257 = sor.u32 %s255, %s256
    %s258 = sand.u32 15, %s257
    %v259 = vld [vmem:[%s249] sm:%s258]
    %v260 = vunpack.c.l.bf16 %v259
    %v261 = vunpack.c.h.bf16 %v259
    %v262 = vlaneseq
    %v263 = vand.u32 %v262, 127
    %vm265 = vcmp.lt.s32.totalorder %v263, 96
    %v266 = vsel %vm265, %v260, %v10
    %s267 = scalar_lea.vmem [#allocation9], 40
    %v268 = vpack.c.bf16 0.0, %v266
    %s270 = ssub.s32 16, 1
    %271 = vst [vmem:[%s267] sm:%s270] %v268
    %s272 = scalar_lea.vmem %s2, 44
    %s274 = sor.u32 255, 127
    %s275 = sand.u32 %s274, 85
    %s276 = sshrl.u32 %s275, 1
    %s277 = sor.u32 %s275, %s276
    %s278 = sand.u32 51, %s277
    %s279 = sshrl.u32 %s278, 2
    %s280 = sor.u32 %s278, %s279
    %s281 = sand.u32 15, %s280
    %v282 = vld [vmem:[%s272] sm:%s281]
    %v283 = vunpack.c.l.bf16 %v282
    %v284 = vunpack.c.h.bf16 %v282
    %v285 = vlaneseq
    %v286 = vand.u32 %v285, 127
    %vm288 = vcmp.lt.s32.totalorder %v286, 96
    %v289 = vsel %vm288, %v283, %v10
    %s290 = scalar_lea.vmem [#allocation9], 44
    %v291 = vpack.c.bf16 0.0, %v289
    %s293 = ssub.s32 16, 1
    %294 = vst [vmem:[%s290] sm:%s293] %v291
    %s295 = scalar_lea.vmem %s2, 48
    %s297 = sor.u32 255, 127
    %s298 = sand.u32 %s297, 85
    %s299 = sshrl.u32 %s298, 1
    %s300 = sor.u32 %s298, %s299
    %s301 = sand.u32 51, %s300
    %s302 = sshrl.u32 %s301, 2
    %s303 = sor.u32 %s301, %s302
    %s304 = sand.u32 15, %s303
    %v305 = vld [vmem:[%s295] sm:%s304]
    %v306 = vunpack.c.l.bf16 %v305
    %v307 = vunpack.c.h.bf16 %v305
    %v308 = vlaneseq
    %v309 = vand.u32 %v308, 127
    %vm311 = vcmp.lt.s32.totalorder %v309, 96
    %v312 = vsel %vm311, %v306, %v10
    %s313 = scalar_lea.vmem [#allocation9], 48
    %v314 = vpack.c.bf16 0.0, %v312
    %s316 = ssub.s32 16, 1
    %317 = vst [vmem:[%s313] sm:%s316] %v314
    %s318 = scalar_lea.vmem %s2, 52
    %s320 = sor.u32 255, 127
    %s321 = sand.u32 %s320, 85
    %s322 = sshrl.u32 %s321, 1
    %s323 = sor.u32 %s321, %s322
    %s324 = sand.u32 51, %s323
    %s325 = sshrl.u32 %s324, 2
    %s326 = sor.u32 %s324, %s325
    %s327 = sand.u32 15, %s326
    %v328 = vld [vmem:[%s318] sm:%s327]
    %v329 = vunpack.c.l.bf16 %v328
    %v330 = vunpack.c.h.bf16 %v328
    %v331 = vlaneseq
    %v332 = vand.u32 %v331, 127
    %vm334 = vcmp.lt.s32.totalorder %v332, 96
    %v335 = vsel %vm334, %v329, %v10
    %s336 = scalar_lea.vmem [#allocation9], 52
    %v337 = vpack.c.bf16 0.0, %v335
    %s339 = ssub.s32 16, 1
    %340 = vst [vmem:[%s336] sm:%s339] %v337
    %s341 = scalar_lea.vmem %s2, 56
    %s343 = sor.u32 255, 127
    %s344 = sand.u32 %s343, 85
    %s345 = sshrl.u32 %s344, 1
    %s346 = sor.u32 %s344, %s345
    %s347 = sand.u32 51, %s346
    %s348 = sshrl.u32 %s347, 2
    %s349 = sor.u32 %s347, %s348
    %s350 = sand.u32 15, %s349
    %v351 = vld [vmem:[%s341] sm:%s350]
    %v352 = vunpack.c.l.bf16 %v351
    %v353 = vunpack.c.h.bf16 %v351
    %v354 = vlaneseq
    %v355 = vand.u32 %v354, 127
    %vm357 = vcmp.lt.s32.totalorder %v355, 96
    %v358 = vsel %vm357, %v352, %v10
    %s359 = scalar_lea.vmem [#allocation9], 56
    %v360 = vpack.c.bf16 0.0, %v358
    %s362 = ssub.s32 16, 1
    %363 = vst [vmem:[%s359] sm:%s362] %v360
    %s364 = scalar_lea.vmem %s2, 60
    %s366 = sor.u32 255, 127
    %s367 = sand.u32 %s366, 85
    %s368 = sshrl.u32 %s367, 1
    %s369 = sor.u32 %s367, %s368
    %s370 = sand.u32 51, %s369
    %s371 = sshrl.u32 %s370, 2
    %s372 = sor.u32 %s370, %s371
    %s373 = sand.u32 15, %s372
    %v374 = vld [vmem:[%s364] sm:%s373]
    %v375 = vunpack.c.l.bf16 %v374
    %v376 = vunpack.c.h.bf16 %v374
    %v377 = vlaneseq
    %v378 = vand.u32 %v377, 127
    %vm380 = vcmp.lt.s32.totalorder %v378, 96
    %v381 = vsel %vm380, %v375, %v10
    %s382 = scalar_lea.vmem [#allocation9], 60
    %v383 = vpack.c.bf16 0.0, %v381
    %s385 = ssub.s32 16, 1
    %386 = vst [vmem:[%s382] sm:%s385] %v383
    %s387 = scalar_lea.vmem %s2, 64
    %s389 = sor.u32 255, 127
    %s390 = sand.u32 %s389, 85
    %s391 = sshrl.u32 %s390, 1
    %s392 = sor.u32 %s390, %s391
    %s393 = sand.u32 51, %s392
    %s394 = sshrl.u32 %s393, 2
    %s395 = sor.u32 %s393, %s394
    %s396 = sand.u32 15, %s395
    %v397 = vld [vmem:[%s387] sm:%s396]
    %v398 = vunpack.c.l.bf16 %v397
    %v399 = vunpack.c.h.bf16 %v397
    %v400 = vlaneseq
    %v401 = vand.u32 %v400, 127
    %vm403 = vcmp.lt.s32.totalorder %v401, 96
    %v404 = vsel %vm403, %v398, %v10
    %s405 = scalar_lea.vmem [#allocation9], 64
    %v406 = vpack.c.bf16 0.0, %v404
    %s408 = ssub.s32 16, 1
    %409 = vst [vmem:[%s405] sm:%s408] %v406
    %s410 = scalar_lea.vmem %s2, 68
    %s412 = sor.u32 255, 127
    %s413 = sand.u32 %s412, 85
    %s414 = sshrl.u32 %s413, 1
    %s415 = sor.u32 %s413, %s414
    %s416 = sand.u32 51, %s415
    %s417 = sshrl.u32 %s416, 2
    %s418 = sor.u32 %s416, %s417
    %s419 = sand.u32 15, %s418
    %v420 = vld [vmem:[%s410] sm:%s419]
    %v421 = vunpack.c.l.bf16 %v420
    %v422 = vunpack.c.h.bf16 %v420
    %v423 = vlaneseq
    %v424 = vand.u32 %v423, 127
    %vm426 = vcmp.lt.s32.totalorder %v424, 96
    %v427 = vsel %vm426, %v421, %v10
    %s428 = scalar_lea.vmem [#allocation9], 68
    %v429 = vpack.c.bf16 0.0, %v427
    %s431 = ssub.s32 16, 1
    %432 = vst [vmem:[%s428] sm:%s431] %v429
    %s433 = scalar_lea.vmem %s2, 72
    %s435 = sor.u32 255, 127
    %s436 = sand.u32 %s435, 85
    %s437 = sshrl.u32 %s436, 1
    %s438 = sor.u32 %s436, %s437
    %s439 = sand.u32 51, %s438
    %s440 = sshrl.u32 %s439, 2
    %s441 = sor.u32 %s439, %s440
    %s442 = sand.u32 15, %s441
    %v443 = vld [vmem:[%s433] sm:%s442]
    %v444 = vunpack.c.l.bf16 %v443
    %v445 = vunpack.c.h.bf16 %v443
    %v446 = vlaneseq
    %v447 = vand.u32 %v446, 127
    %vm449 = vcmp.lt.s32.totalorder %v447, 96
    %v450 = vsel %vm449, %v444, %v10
    %s451 = scalar_lea.vmem [#allocation9], 72
    %v452 = vpack.c.bf16 0.0, %v450
    %s454 = ssub.s32 16, 1
    %455 = vst [vmem:[%s451] sm:%s454] %v452
    %s456 = scalar_lea.vmem %s2, 76
    %s458 = sor.u32 255, 127
    %s459 = sand.u32 %s458, 85
    %s460 = sshrl.u32 %s459, 1
    %s461 = sor.u32 %s459, %s460
    %s462 = sand.u32 51, %s461
    %s463 = sshrl.u32 %s462, 2
    %s464 = sor.u32 %s462, %s463
    %s465 = sand.u32 15, %s464
    %v466 = vld [vmem:[%s456] sm:%s465]
    %v467 = vunpack.c.l.bf16 %v466
    %v468 = vunpack.c.h.bf16 %v466
    %v469 = vlaneseq
    %v470 = vand.u32 %v469, 127
    %vm472 = vcmp.lt.s32.totalorder %v470, 96
    %v473 = vsel %vm472, %v467, %v10
    %s474 = scalar_lea.vmem [#allocation9], 76
    %v475 = vpack.c.bf16 0.0, %v473
    %s477 = ssub.s32 16, 1
    %478 = vst [vmem:[%s474] sm:%s477] %v475
    %s479 = scalar_lea.vmem %s2, 80
    %s481 = sor.u32 255, 127
    %s482 = sand.u32 %s481, 85
    %s483 = sshrl.u32 %s482, 1
    %s484 = sor.u32 %s482, %s483
    %s485 = sand.u32 51, %s484
    %s486 = sshrl.u32 %s485, 2
    %s487 = sor.u32 %s485, %s486
    %s488 = sand.u32 15, %s487
    %v489 = vld [vmem:[%s479] sm:%s488]
    %v490 = vunpack.c.l.bf16 %v489
    %v491 = vunpack.c.h.bf16 %v489
    %v492 = vlaneseq
    %v493 = vand.u32 %v492, 127
    %vm495 = vcmp.lt.s32.totalorder %v493, 96
    %v496 = vsel %vm495, %v490, %v10
    %s497 = scalar_lea.vmem [#allocation9], 80
    %v498 = vpack.c.bf16 0.0, %v496
    %s500 = ssub.s32 16, 1
    %501 = vst [vmem:[%s497] sm:%s500] %v498
    %s502 = scalar_lea.vmem %s2, 84
    %s504 = sor.u32 255, 127
    %s505 = sand.u32 %s504, 85
    %s506 = sshrl.u32 %s505, 1
    %s507 = sor.u32 %s505, %s506
    %s508 = sand.u32 51, %s507
    %s509 = sshrl.u32 %s508, 2
    %s510 = sor.u32 %s508, %s509
    %s511 = sand.u32 15, %s510
    %v512 = vld [vmem:[%s502] sm:%s511]
    %v513 = vunpack.c.l.bf16 %v512
    %v514 = vunpack.c.h.bf16 %v512
    %v515 = vlaneseq
    %v516 = vand.u32 %v515, 127
    %vm518 = vcmp.lt.s32.totalorder %v516, 96
    %v519 = vsel %vm518, %v513, %v10
    %s520 = scalar_lea.vmem [#allocation9], 84
    %v521 = vpack.c.bf16 0.0, %v519
    %s523 = ssub.s32 16, 1
    %524 = vst [vmem:[%s520] sm:%s523] %v521
    %s525 = scalar_lea.vmem %s2, 88
    %s527 = sor.u32 255, 127
    %s528 = sand.u32 %s527, 85
    %s529 = sshrl.u32 %s528, 1
    %s530 = sor.u32 %s528, %s529
    %s531 = sand.u32 51, %s530
    %s532 = sshrl.u32 %s531, 2
    %s533 = sor.u32 %s531, %s532
    %s534 = sand.u32 15, %s533
    %v535 = vld [vmem:[%s525] sm:%s534]
    %v536 = vunpack.c.l.bf16 %v535
    %v537 = vunpack.c.h.bf16 %v535
    %v538 = vlaneseq
    %v539 = vand.u32 %v538, 127
    %vm541 = vcmp.lt.s32.totalorder %v539, 96
    %v542 = vsel %vm541, %v536, %v10
    %s543 = scalar_lea.vmem [#allocation9], 88
    %v544 = vpack.c.bf16 0.0, %v542
    %s546 = ssub.s32 16, 1
    %547 = vst [vmem:[%s543] sm:%s546] %v544
    %s548 = scalar_lea.vmem %s2, 92
    %s550 = sor.u32 255, 127
    %s551 = sand.u32 %s550, 85
    %s552 = sshrl.u32 %s551, 1
    %s553 = sor.u32 %s551, %s552
    %s554 = sand.u32 51, %s553
    %s555 = sshrl.u32 %s554, 2
    %s556 = sor.u32 %s554, %s555
    %s557 = sand.u32 15, %s556
    %v558 = vld [vmem:[%s548] sm:%s557]
    %v559 = vunpack.c.l.bf16 %v558
    %v560 = vunpack.c.h.bf16 %v558
    %v561 = vlaneseq
    %v562 = vand.u32 %v561, 127
    %vm564 = vcmp.lt.s32.totalorder %v562, 96
    %v565 = vsel %vm564, %v559, %v10
    %s566 = scalar_lea.vmem [#allocation9], 92
    %v567 = vpack.c.bf16 0.0, %v565
    %s569 = ssub.s32 16, 1
    %570 = vst [vmem:[%s566] sm:%s569] %v567
    %s571 = scalar_lea.vmem %s2, 96
    %s573 = sor.u32 255, 127
    %s574 = sand.u32 %s573, 85
    %s575 = sshrl.u32 %s574, 1
    %s576 = sor.u32 %s574, %s575
    %s577 = sand.u32 51, %s576
    %s578 = sshrl.u32 %s577, 2
    %s579 = sor.u32 %s577, %s578
    %s580 = sand.u32 15, %s579
    %v581 = vld [vmem:[%s571] sm:%s580]
    %v582 = vunpack.c.l.bf16 %v581
    %v583 = vunpack.c.h.bf16 %v581
    %v584 = vlaneseq
    %v585 = vand.u32 %v584, 127
    %vm587 = vcmp.lt.s32.totalorder %v585, 96
    %v588 = vsel %vm587, %v582, %v10
    %s589 = scalar_lea.vmem [#allocation9], 96
    %v590 = vpack.c.bf16 0.0, %v588
    %s592 = ssub.s32 16, 1
    %593 = vst [vmem:[%s589] sm:%s592] %v590
    %s594 = scalar_lea.vmem %s2, 100
    %s596 = sor.u32 255, 127
    %s597 = sand.u32 %s596, 85
    %s598 = sshrl.u32 %s597, 1
    %s599 = sor.u32 %s597, %s598
    %s600 = sand.u32 51, %s599
    %s601 = sshrl.u32 %s600, 2
    %s602 = sor.u32 %s600, %s601
    %s603 = sand.u32 15, %s602
    %v604 = vld [vmem:[%s594] sm:%s603]
    %v605 = vunpack.c.l.bf16 %v604
    %v606 = vunpack.c.h.bf16 %v604
    %v607 = vlaneseq
    %v608 = vand.u32 %v607, 127
    %vm610 = vcmp.lt.s32.totalorder %v608, 96
    %v611 = vsel %vm610, %v605, %v10
    %s612 = scalar_lea.vmem [#allocation9], 100
    %v613 = vpack.c.bf16 0.0, %v611
    %s615 = ssub.s32 16, 1
    %616 = vst [vmem:[%s612] sm:%s615] %v613
    %s617 = scalar_lea.vmem %s2, 104
    %s619 = sor.u32 255, 127
    %s620 = sand.u32 %s619, 85
    %s621 = sshrl.u32 %s620, 1
    %s622 = sor.u32 %s620, %s621
    %s623 = sand.u32 51, %s622
    %s624 = sshrl.u32 %s623, 2
    %s625 = sor.u32 %s623, %s624
    %s626 = sand.u32 15, %s625
    %v627 = vld [vmem:[%s617] sm:%s626]
    %v628 = vunpack.c.l.bf16 %v627
    %v629 = vunpack.c.h.bf16 %v627
    %v630 = vlaneseq
    %v631 = vand.u32 %v630, 127
    %vm633 = vcmp.lt.s32.totalorder %v631, 96
    %v634 = vsel %vm633, %v628, %v10
    %s635 = scalar_lea.vmem [#allocation9], 104
    %v636 = vpack.c.bf16 0.0, %v634
    %s638 = ssub.s32 16, 1
    %639 = vst [vmem:[%s635] sm:%s638] %v636
    %s640 = scalar_lea.vmem %s2, 108
    %s642 = sor.u32 255, 127
    %s643 = sand.u32 %s642, 85
    %s644 = sshrl.u32 %s643, 1
    %s645 = sor.u32 %s643, %s644
    %s646 = sand.u32 51, %s645
    %s647 = sshrl.u32 %s646, 2
    %s648 = sor.u32 %s646, %s647
    %s649 = sand.u32 15, %s648
    %v650 = vld [vmem:[%s640] sm:%s649]
    %v651 = vunpack.c.l.bf16 %v650
    %v652 = vunpack.c.h.bf16 %v650
    %v653 = vlaneseq
    %v654 = vand.u32 %v653, 127
    %vm656 = vcmp.lt.s32.totalorder %v654, 96
    %v657 = vsel %vm656, %v651, %v10
    %s658 = scalar_lea.vmem [#allocation9], 108
    %v659 = vpack.c.bf16 0.0, %v657
    %s661 = ssub.s32 16, 1
    %662 = vst [vmem:[%s658] sm:%s661] %v659
    %s663 = scalar_lea.vmem %s2, 112
    %s665 = sor.u32 255, 127
    %s666 = sand.u32 %s665, 85
    %s667 = sshrl.u32 %s666, 1
    %s668 = sor.u32 %s666, %s667
    %s669 = sand.u32 51, %s668
    %s670 = sshrl.u32 %s669, 2
    %s671 = sor.u32 %s669, %s670
    %s672 = sand.u32 15, %s671
    %v673 = vld [vmem:[%s663] sm:%s672]
    %v674 = vunpack.c.l.bf16 %v673
    %v675 = vunpack.c.h.bf16 %v673
    %v676 = vlaneseq
    %v677 = vand.u32 %v676, 127
    %vm679 = vcmp.lt.s32.totalorder %v677, 96
    %v680 = vsel %vm679, %v674, %v10
    %s681 = scalar_lea.vmem [#allocation9], 112
    %v682 = vpack.c.bf16 0.0, %v680
    %s684 = ssub.s32 16, 1
    %685 = vst [vmem:[%s681] sm:%s684] %v682
    %s686 = scalar_lea.vmem %s2, 116
    %s688 = sor.u32 255, 127
    %s689 = sand.u32 %s688, 85
    %s690 = sshrl.u32 %s689, 1
    %s691 = sor.u32 %s689, %s690
    %s692 = sand.u32 51, %s691
    %s693 = sshrl.u32 %s692, 2
    %s694 = sor.u32 %s692, %s693
    %s695 = sand.u32 15, %s694
    %v696 = vld [vmem:[%s686] sm:%s695]
    %v697 = vunpack.c.l.bf16 %v696
    %v698 = vunpack.c.h.bf16 %v696
    %v699 = vlaneseq
    %v700 = vand.u32 %v699, 127
    %vm702 = vcmp.lt.s32.totalorder %v700, 96
    %v703 = vsel %vm702, %v697, %v10
    %s704 = scalar_lea.vmem [#allocation9], 116
    %v705 = vpack.c.bf16 0.0, %v703
    %s707 = ssub.s32 16, 1
    %708 = vst [vmem:[%s704] sm:%s707] %v705
    %s709 = scalar_lea.vmem %s2, 120
    %s711 = sor.u32 255, 127
    %s712 = sand.u32 %s711, 85
    %s713 = sshrl.u32 %s712, 1
    %s714 = sor.u32 %s712, %s713
    %s715 = sand.u32 51, %s714
    %s716 = sshrl.u32 %s715, 2
    %s717 = sor.u32 %s715, %s716
    %s718 = sand.u32 15, %s717
    %v719 = vld [vmem:[%s709] sm:%s718]
    %v720 = vunpack.c.l.bf16 %v719
    %v721 = vunpack.c.h.bf16 %v719
    %v722 = vlaneseq
    %v723 = vand.u32 %v722, 127
    %vm725 = vcmp.lt.s32.totalorder %v723, 96
    %v726 = vsel %vm725, %v720, %v10
    %s727 = scalar_lea.vmem [#allocation9], 120
    %v728 = vpack.c.bf16 0.0, %v726
    %s730 = ssub.s32 16, 1
    %731 = vst [vmem:[%s727] sm:%s730] %v728
    %s732 = scalar_lea.vmem %s2, 124
    %s734 = sor.u32 255, 127
    %s735 = sand.u32 %s734, 85
    %s736 = sshrl.u32 %s735, 1
    %s737 = sor.u32 %s735, %s736
    %s738 = sand.u32 51, %s737
    %s739 = sshrl.u32 %s738, 2
    %s740 = sor.u32 %s738, %s739
    %s741 = sand.u32 15, %s740
    %v742 = vld [vmem:[%s732] sm:%s741]
    %v743 = vunpack.c.l.bf16 %v742
    %v744 = vunpack.c.h.bf16 %v742
    %v745 = vlaneseq
    %v746 = vand.u32 %v745, 127
    %vm748 = vcmp.lt.s32.totalorder %v746, 96
    %v749 = vsel %vm748, %v743, %v10
    %s750 = scalar_lea.vmem [#allocation9], 124
    %v751 = vpack.c.bf16 0.0, %v749
    %s753 = ssub.s32 16, 1
    %754 = vst [vmem:[%s750] sm:%s753] %v751
    %s755 = scalar_lea.vmem %s2, 128
    %s757 = sor.u32 255, 127
    %s758 = sand.u32 %s757, 85
    %s759 = sshrl.u32 %s758, 1
    %s760 = sor.u32 %s758, %s759
    %s761 = sand.u32 51, %s760
    %s762 = sshrl.u32 %s761, 2
    %s763 = sor.u32 %s761, %s762
    %s764 = sand.u32 15, %s763
    %v765 = vld [vmem:[%s755] sm:%s764]
    %v766 = vunpack.c.l.bf16 %v765
    %v767 = vunpack.c.h.bf16 %v765
    %v768 = vlaneseq
    %v769 = vand.u32 %v768, 127
    %vm771 = vcmp.lt.s32.totalorder %v769, 96
    %v772 = vsel %vm771, %v766, %v10
    %s773 = scalar_lea.vmem [#allocation9], 128
    %v774 = vpack.c.bf16 0.0, %v772
    %s776 = ssub.s32 16, 1
    %777 = vst [vmem:[%s773] sm:%s776] %v774
    %s778 = scalar_lea.vmem %s2, 132
    %s780 = sor.u32 255, 127
    %s781 = sand.u32 %s780, 85
    %s782 = sshrl.u32 %s781, 1
    %s783 = sor.u32 %s781, %s782
    %s784 = sand.u32 51, %s783
    %s785 = sshrl.u32 %s784, 2
    %s786 = sor.u32 %s784, %s785
    %s787 = sand.u32 15, %s786
    %v788 = vld [vmem:[%s778] sm:%s787]
    %v789 = vunpack.c.l.bf16 %v788
    %v790 = vunpack.c.h.bf16 %v788
    %v791 = vlaneseq
    %v792 = vand.u32 %v791, 127
    %vm794 = vcmp.lt.s32.totalorder %v792, 96
    %v795 = vsel %vm794, %v789, %v10
    %s796 = scalar_lea.vmem [#allocation9], 132
    %v797 = vpack.c.bf16 0.0, %v795
    %s799 = ssub.s32 16, 1
    %800 = vst [vmem:[%s796] sm:%s799] %v797
    %s801 = scalar_lea.vmem %s2, 136
    %s803 = sor.u32 255, 127
    %s804 = sand.u32 %s803, 85
    %s805 = sshrl.u32 %s804, 1
    %s806 = sor.u32 %s804, %s805
    %s807 = sand.u32 51, %s806
    %s808 = sshrl.u32 %s807, 2
    %s809 = sor.u32 %s807, %s808
    %s810 = sand.u32 15, %s809
    %v811 = vld [vmem:[%s801] sm:%s810]
    %v812 = vunpack.c.l.bf16 %v811
    %v813 = vunpack.c.h.bf16 %v811
    %v814 = vlaneseq
    %v815 = vand.u32 %v814, 127
    %vm817 = vcmp.lt.s32.totalorder %v815, 96
    %v818 = vsel %vm817, %v812, %v10
    %s819 = scalar_lea.vmem [#allocation9], 136
    %v820 = vpack.c.bf16 0.0, %v818
    %s822 = ssub.s32 16, 1
    %823 = vst [vmem:[%s819] sm:%s822] %v820
    %s824 = scalar_lea.vmem %s2, 140
    %s826 = sor.u32 255, 127
    %s827 = sand.u32 %s826, 85
    %s828 = sshrl.u32 %s827, 1
    %s829 = sor.u32 %s827, %s828
    %s830 = sand.u32 51, %s829
    %s831 = sshrl.u32 %s830, 2
    %s832 = sor.u32 %s830, %s831
    %s833 = sand.u32 15, %s832
    %v834 = vld [vmem:[%s824] sm:%s833]
    %v835 = vunpack.c.l.bf16 %v834
    %v836 = vunpack.c.h.bf16 %v834
    %v837 = vlaneseq
    %v838 = vand.u32 %v837, 127
    %vm840 = vcmp.lt.s32.totalorder %v838, 96
    %v841 = vsel %vm840, %v835, %v10
    %s842 = scalar_lea.vmem [#allocation9], 140
    %v843 = vpack.c.bf16 0.0, %v841
    %s845 = ssub.s32 16, 1
    %846 = vst [vmem:[%s842] sm:%s845] %v843
    %s847 = scalar_lea.vmem %s2, 144
    %s849 = sor.u32 255, 127
    %s850 = sand.u32 %s849, 85
    %s851 = sshrl.u32 %s850, 1
    %s852 = sor.u32 %s850, %s851
    %s853 = sand.u32 51, %s852
    %s854 = sshrl.u32 %s853, 2
    %s855 = sor.u32 %s853, %s854
    %s856 = sand.u32 15, %s855
    %v857 = vld [vmem:[%s847] sm:%s856]
    %v858 = vunpack.c.l.bf16 %v857
    %v859 = vunpack.c.h.bf16 %v857
    %v860 = vlaneseq
    %v861 = vand.u32 %v860, 127
    %vm863 = vcmp.lt.s32.totalorder %v861, 96
    %v864 = vsel %vm863, %v858, %v10
    %s865 = scalar_lea.vmem [#allocation9], 144
    %v866 = vpack.c.bf16 0.0, %v864
    %s868 = ssub.s32 16, 1
    %869 = vst [vmem:[%s865] sm:%s868] %v866
    %s870 = scalar_lea.vmem %s2, 148
    %s872 = sor.u32 255, 127
    %s873 = sand.u32 %s872, 85
    %s874 = sshrl.u32 %s873, 1
    %s875 = sor.u32 %s873, %s874
    %s876 = sand.u32 51, %s875
    %s877 = sshrl.u32 %s876, 2
    %s878 = sor.u32 %s876, %s877
    %s879 = sand.u32 15, %s878
    %v880 = vld [vmem:[%s870] sm:%s879]
    %v881 = vunpack.c.l.bf16 %v880
    %v882 = vunpack.c.h.bf16 %v880
    %v883 = vlaneseq
    %v884 = vand.u32 %v883, 127
    %vm886 = vcmp.lt.s32.totalorder %v884, 96
    %v887 = vsel %vm886, %v881, %v10
    %s888 = scalar_lea.vmem [#allocation9], 148
    %v889 = vpack.c.bf16 0.0, %v887
    %s891 = ssub.s32 16, 1
    %892 = vst [vmem:[%s888] sm:%s891] %v889
    %s893 = scalar_lea.vmem %s2, 152
    %s895 = sor.u32 255, 127
    %s896 = sand.u32 %s895, 85
    %s897 = sshrl.u32 %s896, 1
    %s898 = sor.u32 %s896, %s897
    %s899 = sand.u32 51, %s898
    %s900 = sshrl.u32 %s899, 2
    %s901 = sor.u32 %s899, %s900
    %s902 = sand.u32 15, %s901
    %v903 = vld [vmem:[%s893] sm:%s902]
    %v904 = vunpack.c.l.bf16 %v903
    %v905 = vunpack.c.h.bf16 %v903
    %v906 = vlaneseq
    %v907 = vand.u32 %v906, 127
    %vm909 = vcmp.lt.s32.totalorder %v907, 96
    %v910 = vsel %vm909, %v904, %v10
    %s911 = scalar_lea.vmem [#allocation9], 152
    %v912 = vpack.c.bf16 0.0, %v910
    %s914 = ssub.s32 16, 1
    %915 = vst [vmem:[%s911] sm:%s914] %v912
    %s916 = scalar_lea.vmem %s2, 156
    %s918 = sor.u32 255, 127
    %s919 = sand.u32 %s918, 85
    %s920 = sshrl.u32 %s919, 1
    %s921 = sor.u32 %s919, %s920
    %s922 = sand.u32 51, %s921
    %s923 = sshrl.u32 %s922, 2
    %s924 = sor.u32 %s922, %s923
    %s925 = sand.u32 15, %s924
    %v926 = vld [vmem:[%s916] sm:%s925]
    %v927 = vunpack.c.l.bf16 %v926
    %v928 = vunpack.c.h.bf16 %v926
    %v929 = vlaneseq
    %v930 = vand.u32 %v929, 127
    %vm932 = vcmp.lt.s32.totalorder %v930, 96
    %v933 = vsel %vm932, %v927, %v10
    %s934 = scalar_lea.vmem [#allocation9], 156
    %v935 = vpack.c.bf16 0.0, %v933
    %s937 = ssub.s32 16, 1
    %938 = vst [vmem:[%s934] sm:%s937] %v935
    %s939 = scalar_lea.vmem %s2, 160
    %s941 = sor.u32 255, 127
    %s942 = sand.u32 %s941, 85
    %s943 = sshrl.u32 %s942, 1
    %s944 = sor.u32 %s942, %s943
    %s945 = sand.u32 51, %s944
    %s946 = sshrl.u32 %s945, 2
    %s947 = sor.u32 %s945, %s946
    %s948 = sand.u32 15, %s947
    %v949 = vld [vmem:[%s939] sm:%s948]
    %v950 = vunpack.c.l.bf16 %v949
    %v951 = vunpack.c.h.bf16 %v949
    %v952 = vlaneseq
    %v953 = vand.u32 %v952, 127
    %vm955 = vcmp.lt.s32.totalorder %v953, 96
    %v956 = vsel %vm955, %v950, %v10
    %s957 = scalar_lea.vmem [#allocation9], 160
    %v958 = vpack.c.bf16 0.0, %v956
    %s960 = ssub.s32 16, 1
    %961 = vst [vmem:[%s957] sm:%s960] %v958
    %s962 = scalar_lea.vmem %s2, 164
    %s964 = sor.u32 255, 127
    %s965 = sand.u32 %s964, 85
    %s966 = sshrl.u32 %s965, 1
    %s967 = sor.u32 %s965, %s966
    %s968 = sand.u32 51, %s967
    %s969 = sshrl.u32 %s968, 2
    %s970 = sor.u32 %s968, %s969
    %s971 = sand.u32 15, %s970
    %v972 = vld [vmem:[%s962] sm:%s971]
    %v973 = vunpack.c.l.bf16 %v972
    %v974 = vunpack.c.h.bf16 %v972
    %v975 = vlaneseq
    %v976 = vand.u32 %v975, 127
    %vm978 = vcmp.lt.s32.totalorder %v976, 96
    %v979 = vsel %vm978, %v973, %v10
    %s980 = scalar_lea.vmem [#allocation9], 164
    %v981 = vpack.c.bf16 0.0, %v979
    %s983 = ssub.s32 16, 1
    %984 = vst [vmem:[%s980] sm:%s983] %v981
    %s985 = scalar_lea.vmem %s2, 168
    %s987 = sor.u32 255, 127
    %s988 = sand.u32 %s987, 85
    %s989 = sshrl.u32 %s988, 1
    %s990 = sor.u32 %s988, %s989
    %s991 = sand.u32 51, %s990
    %s992 = sshrl.u32 %s991, 2
    %s993 = sor.u32 %s991, %s992
    %s994 = sand.u32 15, %s993
    %v995 = vld [vmem:[%s985] sm:%s994]
    %v996 = vunpack.c.l.bf16 %v995
    %v997 = vunpack.c.h.bf16 %v995
    %v998 = vlaneseq
    %v999 = vand.u32 %v998, 127
    %vm1001 = vcmp.lt.s32.totalorder %v999, 96
    %v1002 = vsel %vm1001, %v996, %v10
    %s1003 = scalar_lea.vmem [#allocation9], 168
    %v1004 = vpack.c.bf16 0.0, %v1002
    %s1006 = ssub.s32 16, 1
    %1007 = vst [vmem:[%s1003] sm:%s1006] %v1004
    %s1008 = scalar_lea.vmem %s2, 172
    %s1010 = sor.u32 255, 127
    %s1011 = sand.u32 %s1010, 85
    %s1012 = sshrl.u32 %s1011, 1
    %s1013 = sor.u32 %s1011, %s1012
    %s1014 = sand.u32 51, %s1013
    %s1015 = sshrl.u32 %s1014, 2
    %s1016 = sor.u32 %s1014, %s1015
    %s1017 = sand.u32 15, %s1016
    %v1018 = vld [vmem:[%s1008] sm:%s1017]
    %v1019 = vunpack.c.l.bf16 %v1018
    %v1020 = vunpack.c.h.bf16 %v1018
    %v1021 = vlaneseq
    %v1022 = vand.u32 %v1021, 127
    %vm1024 = vcmp.lt.s32.totalorder %v1022, 96
    %v1025 = vsel %vm1024, %v1019, %v10
    %s1026 = scalar_lea.vmem [#allocation9], 172
    %v1027 = vpack.c.bf16 0.0, %v1025
    %s1029 = ssub.s32 16, 1
    %1030 = vst [vmem:[%s1026] sm:%s1029] %v1027
    %s1031 = scalar_lea.vmem %s2, 176
    %s1033 = sor.u32 255, 127
    %s1034 = sand.u32 %s1033, 85
    %s1035 = sshrl.u32 %s1034, 1
    %s1036 = sor.u32 %s1034, %s1035
    %s1037 = sand.u32 51, %s1036
    %s1038 = sshrl.u32 %s1037, 2
    %s1039 = sor.u32 %s1037, %s1038
    %s1040 = sand.u32 15, %s1039
    %v1041 = vld [vmem:[%s1031] sm:%s1040]
    %v1042 = vunpack.c.l.bf16 %v1041
    %v1043 = vunpack.c.h.bf16 %v1041
    %v1044 = vlaneseq
    %v1045 = vand.u32 %v1044, 127
    %vm1047 = vcmp.lt.s32.totalorder %v1045, 96
    %v1048 = vsel %vm1047, %v1042, %v10
    %s1049 = scalar_lea.vmem [#allocation9], 176
    %v1050 = vpack.c.bf16 0.0, %v1048
    %s1052 = ssub.s32 16, 1
    %1053 = vst [vmem:[%s1049] sm:%s1052] %v1050
    %s1054 = scalar_lea.vmem %s2, 180
    %s1056 = sor.u32 255, 127
    %s1057 = sand.u32 %s1056, 85
    %s1058 = sshrl.u32 %s1057, 1
    %s1059 = sor.u32 %s1057, %s1058
    %s1060 = sand.u32 51, %s1059
    %s1061 = sshrl.u32 %s1060, 2
    %s1062 = sor.u32 %s1060, %s1061
    %s1063 = sand.u32 15, %s1062
    %v1064 = vld [vmem:[%s1054] sm:%s1063]
    %v1065 = vunpack.c.l.bf16 %v1064
    %v1066 = vunpack.c.h.bf16 %v1064
    %v1067 = vlaneseq
    %v1068 = vand.u32 %v1067, 127
    %vm1070 = vcmp.lt.s32.totalorder %v1068, 96
    %v1071 = vsel %vm1070, %v1065, %v10
    %s1072 = scalar_lea.vmem [#allocation9], 180
    %v1073 = vpack.c.bf16 0.0, %v1071
    %s1075 = ssub.s32 16, 1
    %1076 = vst [vmem:[%s1072] sm:%s1075] %v1073
    %s1077 = scalar_lea.vmem %s2, 184
    %s1079 = sor.u32 255, 127
    %s1080 = sand.u32 %s1079, 85
    %s1081 = sshrl.u32 %s1080, 1
    %s1082 = sor.u32 %s1080, %s1081
    %s1083 = sand.u32 51, %s1082
    %s1084 = sshrl.u32 %s1083, 2
    %s1085 = sor.u32 %s1083, %s1084
    %s1086 = sand.u32 15, %s1085
    %v1087 = vld [vmem:[%s1077] sm:%s1086]
    %v1088 = vunpack.c.l.bf16 %v1087
    %v1089 = vunpack.c.h.bf16 %v1087
    %v1090 = vlaneseq
    %v1091 = vand.u32 %v1090, 127
    %vm1093 = vcmp.lt.s32.totalorder %v1091, 96
    %v1094 = vsel %vm1093, %v1088, %v10
    %s1095 = scalar_lea.vmem [#allocation9], 184
    %v1096 = vpack.c.bf16 0.0, %v1094
    %s1098 = ssub.s32 16, 1
    %1099 = vst [vmem:[%s1095] sm:%s1098] %v1096
    %s1100 = scalar_lea.vmem %s2, 188
    %s1102 = sor.u32 255, 127
    %s1103 = sand.u32 %s1102, 85
    %s1104 = sshrl.u32 %s1103, 1
    %s1105 = sor.u32 %s1103, %s1104
    %s1106 = sand.u32 51, %s1105
    %s1107 = sshrl.u32 %s1106, 2
    %s1108 = sor.u32 %s1106, %s1107
    %s1109 = sand.u32 15, %s1108
    %v1110 = vld [vmem:[%s1100] sm:%s1109]
    %v1111 = vunpack.c.l.bf16 %v1110
    %v1112 = vunpack.c.h.bf16 %v1110
    %v1113 = vlaneseq
    %v1114 = vand.u32 %v1113, 127
    %vm1116 = vcmp.lt.s32.totalorder %v1114, 96
    %v1117 = vsel %vm1116, %v1111, %v10
    %s1118 = scalar_lea.vmem [#allocation9], 188
    %v1119 = vpack.c.bf16 0.0, %v1117
    %s1121 = ssub.s32 16, 1
    %1122 = vst [vmem:[%s1118] sm:%s1121] %v1119
    %s1123 = scalar_lea.vmem %s2, 192
    %s1125 = sor.u32 255, 127
    %s1126 = sand.u32 %s1125, 85
    %s1127 = sshrl.u32 %s1126, 1
    %s1128 = sor.u32 %s1126, %s1127
    %s1129 = sand.u32 51, %s1128
    %s1130 = sshrl.u32 %s1129, 2
    %s1131 = sor.u32 %s1129, %s1130
    %s1132 = sand.u32 15, %s1131
    %v1133 = vld [vmem:[%s1123] sm:%s1132]
    %v1134 = vunpack.c.l.bf16 %v1133
    %v1135 = vunpack.c.h.bf16 %v1133
    %v1136 = vlaneseq
    %v1137 = vand.u32 %v1136, 127
    %vm1139 = vcmp.lt.s32.totalorder %v1137, 96
    %v1140 = vsel %vm1139, %v1134, %v10
    %s1141 = scalar_lea.vmem [#allocation9], 192
    %v1142 = vpack.c.bf16 0.0, %v1140
    %s1144 = ssub.s32 16, 1
    %1145 = vst [vmem:[%s1141] sm:%s1144] %v1142
    %s1146 = scalar_lea.vmem %s2, 196
    %s1148 = sor.u32 255, 127
    %s1149 = sand.u32 %s1148, 85
    %s1150 = sshrl.u32 %s1149, 1
    %s1151 = sor.u32 %s1149, %s1150
    %s1152 = sand.u32 51, %s1151
    %s1153 = sshrl.u32 %s1152, 2
    %s1154 = sor.u32 %s1152, %s1153
    %s1155 = sand.u32 15, %s1154
    %v1156 = vld [vmem:[%s1146] sm:%s1155]
    %v1157 = vunpack.c.l.bf16 %v1156
    %v1158 = vunpack.c.h.bf16 %v1156
    %v1159 = vlaneseq
    %v1160 = vand.u32 %v1159, 127
    %vm1162 = vcmp.lt.s32.totalorder %v1160, 96
    %v1163 = vsel %vm1162, %v1157, %v10
    %s1164 = scalar_lea.vmem [#allocation9], 196
    %v1165 = vpack.c.bf16 0.0, %v1163
    %s1167 = ssub.s32 16, 1
    %1168 = vst [vmem:[%s1164] sm:%s1167] %v1165
    %s1169 = scalar_lea.vmem %s2, 200
    %s1171 = sor.u32 255, 127
    %s1172 = sand.u32 %s1171, 85
    %s1173 = sshrl.u32 %s1172, 1
    %s1174 = sor.u32 %s1172, %s1173
    %s1175 = sand.u32 51, %s1174
    %s1176 = sshrl.u32 %s1175, 2
    %s1177 = sor.u32 %s1175, %s1176
    %s1178 = sand.u32 15, %s1177
    %v1179 = vld [vmem:[%s1169] sm:%s1178]
    %v1180 = vunpack.c.l.bf16 %v1179
    %v1181 = vunpack.c.h.bf16 %v1179
    %v1182 = vlaneseq
    %v1183 = vand.u32 %v1182, 127
    %vm1185 = vcmp.lt.s32.totalorder %v1183, 96
    %v1186 = vsel %vm1185, %v1180, %v10
    %s1187 = scalar_lea.vmem [#allocation9], 200
    %v1188 = vpack.c.bf16 0.0, %v1186
    %s1190 = ssub.s32 16, 1
    %1191 = vst [vmem:[%s1187] sm:%s1190] %v1188
    %s1192 = scalar_lea.vmem %s2, 204
    %s1194 = sor.u32 255, 127
    %s1195 = sand.u32 %s1194, 85
    %s1196 = sshrl.u32 %s1195, 1
    %s1197 = sor.u32 %s1195, %s1196
    %s1198 = sand.u32 51, %s1197
    %s1199 = sshrl.u32 %s1198, 2
    %s1200 = sor.u32 %s1198, %s1199
    %s1201 = sand.u32 15, %s1200
    %v1202 = vld [vmem:[%s1192] sm:%s1201]
    %v1203 = vunpack.c.l.bf16 %v1202
    %v1204 = vunpack.c.h.bf16 %v1202
    %v1205 = vlaneseq
    %v1206 = vand.u32 %v1205, 127
    %vm1208 = vcmp.lt.s32.totalorder %v1206, 96
    %v1209 = vsel %vm1208, %v1203, %v10
    %s1210 = scalar_lea.vmem [#allocation9], 204
    %v1211 = vpack.c.bf16 0.0, %v1209
    %s1213 = ssub.s32 16, 1
    %1214 = vst [vmem:[%s1210] sm:%s1213] %v1211
    %s1215 = scalar_lea.vmem %s2, 208
    %s1217 = sor.u32 255, 127
    %s1218 = sand.u32 %s1217, 85
    %s1219 = sshrl.u32 %s1218, 1
    %s1220 = sor.u32 %s1218, %s1219
    %s1221 = sand.u32 51, %s1220
    %s1222 = sshrl.u32 %s1221, 2
    %s1223 = sor.u32 %s1221, %s1222
    %s1224 = sand.u32 15, %s1223
    %v1225 = vld [vmem:[%s1215] sm:%s1224]
    %v1226 = vunpack.c.l.bf16 %v1225
    %v1227 = vunpack.c.h.bf16 %v1225
    %v1228 = vlaneseq
    %v1229 = vand.u32 %v1228, 127
    %vm1231 = vcmp.lt.s32.totalorder %v1229, 96
    %v1232 = vsel %vm1231, %v1226, %v10
    %s1233 = scalar_lea.vmem [#allocation9], 208
    %v1234 = vpack.c.bf16 0.0, %v1232
    %s1236 = ssub.s32 16, 1
    %1237 = vst [vmem:[%s1233] sm:%s1236] %v1234
    %s1238 = scalar_lea.vmem %s2, 212
    %s1240 = sor.u32 255, 127
    %s1241 = sand.u32 %s1240, 85
    %s1242 = sshrl.u32 %s1241, 1
    %s1243 = sor.u32 %s1241, %s1242
    %s1244 = sand.u32 51, %s1243
    %s1245 = sshrl.u32 %s1244, 2
    %s1246 = sor.u32 %s1244, %s1245
    %s1247 = sand.u32 15, %s1246
    %v1248 = vld [vmem:[%s1238] sm:%s1247]
    %v1249 = vunpack.c.l.bf16 %v1248
    %v1250 = vunpack.c.h.bf16 %v1248
    %v1251 = vlaneseq
    %v1252 = vand.u32 %v1251, 127
    %vm1254 = vcmp.lt.s32.totalorder %v1252, 96
    %v1255 = vsel %vm1254, %v1249, %v10
    %s1256 = scalar_lea.vmem [#allocation9], 212
    %v1257 = vpack.c.bf16 0.0, %v1255
    %s1259 = ssub.s32 16, 1
    %1260 = vst [vmem:[%s1256] sm:%s1259] %v1257
    %s1261 = scalar_lea.vmem %s2, 216
    %s1263 = sor.u32 255, 127
    %s1264 = sand.u32 %s1263, 85
    %s1265 = sshrl.u32 %s1264, 1
    %s1266 = sor.u32 %s1264, %s1265
    %s1267 = sand.u32 51, %s1266
    %s1268 = sshrl.u32 %s1267, 2
    %s1269 = sor.u32 %s1267, %s1268
    %s1270 = sand.u32 15, %s1269
    %v1271 = vld [vmem:[%s1261] sm:%s1270]
    %v1272 = vunpack.c.l.bf16 %v1271
    %v1273 = vunpack.c.h.bf16 %v1271
    %v1274 = vlaneseq
    %v1275 = vand.u32 %v1274, 127
    %vm1277 = vcmp.lt.s32.totalorder %v1275, 96
    %v1278 = vsel %vm1277, %v1272, %v10
    %s1279 = scalar_lea.vmem [#allocation9], 216
    %v1280 = vpack.c.bf16 0.0, %v1278
    %s1282 = ssub.s32 16, 1
    %1283 = vst [vmem:[%s1279] sm:%s1282] %v1280
    %s1284 = scalar_lea.vmem %s2, 220
    %s1286 = sor.u32 255, 127
    %s1287 = sand.u32 %s1286, 85
    %s1288 = sshrl.u32 %s1287, 1
    %s1289 = sor.u32 %s1287, %s1288
    %s1290 = sand.u32 51, %s1289
    %s1291 = sshrl.u32 %s1290, 2
    %s1292 = sor.u32 %s1290, %s1291
    %s1293 = sand.u32 15, %s1292
    %v1294 = vld [vmem:[%s1284] sm:%s1293]
    %v1295 = vunpack.c.l.bf16 %v1294
    %v1296 = vunpack.c.h.bf16 %v1294
    %v1297 = vlaneseq
    %v1298 = vand.u32 %v1297, 127
    %vm1300 = vcmp.lt.s32.totalorder %v1298, 96
    %v1301 = vsel %vm1300, %v1295, %v10
    %s1302 = scalar_lea.vmem [#allocation9], 220
    %v1303 = vpack.c.bf16 0.0, %v1301
    %s1305 = ssub.s32 16, 1
    %1306 = vst [vmem:[%s1302] sm:%s1305] %v1303
    %s1307 = scalar_lea.vmem %s2, 224
    %s1309 = sor.u32 255, 127
    %s1310 = sand.u32 %s1309, 85
    %s1311 = sshrl.u32 %s1310, 1
    %s1312 = sor.u32 %s1310, %s1311
    %s1313 = sand.u32 51, %s1312
    %s1314 = sshrl.u32 %s1313, 2
    %s1315 = sor.u32 %s1313, %s1314
    %s1316 = sand.u32 15, %s1315
    %v1317 = vld [vmem:[%s1307] sm:%s1316]
    %v1318 = vunpack.c.l.bf16 %v1317
    %v1319 = vunpack.c.h.bf16 %v1317
    %v1320 = vlaneseq
    %v1321 = vand.u32 %v1320, 127
    %vm1323 = vcmp.lt.s32.totalorder %v1321, 96
    %v1324 = vsel %vm1323, %v1318, %v10
    %s1325 = scalar_lea.vmem [#allocation9], 224
    %v1326 = vpack.c.bf16 0.0, %v1324
    %s1328 = ssub.s32 16, 1
    %1329 = vst [vmem:[%s1325] sm:%s1328] %v1326
    %s1330 = scalar_lea.vmem %s2, 228
    %s1332 = sor.u32 255, 127
    %s1333 = sand.u32 %s1332, 85
    %s1334 = sshrl.u32 %s1333, 1
    %s1335 = sor.u32 %s1333, %s1334
    %s1336 = sand.u32 51, %s1335
    %s1337 = sshrl.u32 %s1336, 2
    %s1338 = sor.u32 %s1336, %s1337
    %s1339 = sand.u32 15, %s1338
    %v1340 = vld [vmem:[%s1330] sm:%s1339]
    %v1341 = vunpack.c.l.bf16 %v1340
    %v1342 = vunpack.c.h.bf16 %v1340
    %v1343 = vlaneseq
    %v1344 = vand.u32 %v1343, 127
    %vm1346 = vcmp.lt.s32.totalorder %v1344, 96
    %v1347 = vsel %vm1346, %v1341, %v10
    %s1348 = scalar_lea.vmem [#allocation9], 228
    %v1349 = vpack.c.bf16 0.0, %v1347
    %s1351 = ssub.s32 16, 1
    %1352 = vst [vmem:[%s1348] sm:%s1351] %v1349
    %s1353 = scalar_lea.vmem %s2, 232
    %s1355 = sor.u32 255, 127
    %s1356 = sand.u32 %s1355, 85
    %s1357 = sshrl.u32 %s1356, 1
    %s1358 = sor.u32 %s1356, %s1357
    %s1359 = sand.u32 51, %s1358
    %s1360 = sshrl.u32 %s1359, 2
    %s1361 = sor.u32 %s1359, %s1360
    %s1362 = sand.u32 15, %s1361
    %v1363 = vld [vmem:[%s1353] sm:%s1362]
    %v1364 = vunpack.c.l.bf16 %v1363
    %v1365 = vunpack.c.h.bf16 %v1363
    %v1366 = vlaneseq
    %v1367 = vand.u32 %v1366, 127
    %vm1369 = vcmp.lt.s32.totalorder %v1367, 96
    %v1370 = vsel %vm1369, %v1364, %v10
    %s1371 = scalar_lea.vmem [#allocation9], 232
    %v1372 = vpack.c.bf16 0.0, %v1370
    %s1374 = ssub.s32 16, 1
    %1375 = vst [vmem:[%s1371] sm:%s1374] %v1372
    %s1376 = scalar_lea.vmem %s2, 236
    %s1378 = sor.u32 255, 127
    %s1379 = sand.u32 %s1378, 85
    %s1380 = sshrl.u32 %s1379, 1
    %s1381 = sor.u32 %s1379, %s1380
    %s1382 = sand.u32 51, %s1381
    %s1383 = sshrl.u32 %s1382, 2
    %s1384 = sor.u32 %s1382, %s1383
    %s1385 = sand.u32 15, %s1384
    %v1386 = vld [vmem:[%s1376] sm:%s1385]
    %v1387 = vunpack.c.l.bf16 %v1386
    %v1388 = vunpack.c.h.bf16 %v1386
    %v1389 = vlaneseq
    %v1390 = vand.u32 %v1389, 127
    %vm1392 = vcmp.lt.s32.totalorder %v1390, 96
    %v1393 = vsel %vm1392, %v1387, %v10
    %s1394 = scalar_lea.vmem [#allocation9], 236
    %v1395 = vpack.c.bf16 0.0, %v1393
    %s1397 = ssub.s32 16, 1
    %1398 = vst [vmem:[%s1394] sm:%s1397] %v1395
    %s1399 = scalar_lea.vmem %s2, 240
    %s1401 = sor.u32 255, 127
    %s1402 = sand.u32 %s1401, 85
    %s1403 = sshrl.u32 %s1402, 1
    %s1404 = sor.u32 %s1402, %s1403
    %s1405 = sand.u32 51, %s1404
    %s1406 = sshrl.u32 %s1405, 2
    %s1407 = sor.u32 %s1405, %s1406
    %s1408 = sand.u32 15, %s1407
    %v1409 = vld [vmem:[%s1399] sm:%s1408]
    %v1410 = vunpack.c.l.bf16 %v1409
    %v1411 = vunpack.c.h.bf16 %v1409
    %v1412 = vlaneseq
    %v1413 = vand.u32 %v1412, 127
    %vm1415 = vcmp.lt.s32.totalorder %v1413, 96
    %v1416 = vsel %vm1415, %v1410, %v10
    %s1417 = scalar_lea.vmem [#allocation9], 240
    %v1418 = vpack.c.bf16 0.0, %v1416
    %s1420 = ssub.s32 16, 1
    %1421 = vst [vmem:[%s1417] sm:%s1420] %v1418
    %s1422 = scalar_lea.vmem %s2, 244
    %s1424 = sor.u32 255, 127
    %s1425 = sand.u32 %s1424, 85
    %s1426 = sshrl.u32 %s1425, 1
    %s1427 = sor.u32 %s1425, %s1426
    %s1428 = sand.u32 51, %s1427
    %s1429 = sshrl.u32 %s1428, 2
    %s1430 = sor.u32 %s1428, %s1429
    %s1431 = sand.u32 15, %s1430
    %v1432 = vld [vmem:[%s1422] sm:%s1431]
    %v1433 = vunpack.c.l.bf16 %v1432
    %v1434 = vunpack.c.h.bf16 %v1432
    %v1435 = vlaneseq
    %v1436 = vand.u32 %v1435, 127
    %vm1438 = vcmp.lt.s32.totalorder %v1436, 96
    %v1439 = vsel %vm1438, %v1433, %v10
    %s1440 = scalar_lea.vmem [#allocation9], 244
    %v1441 = vpack.c.bf16 0.0, %v1439
    %s1443 = ssub.s32 16, 1
    %1444 = vst [vmem:[%s1440] sm:%s1443] %v1441
    %s1445 = scalar_lea.vmem %s2, 248
    %s1447 = sor.u32 255, 127
    %s1448 = sand.u32 %s1447, 85
    %s1449 = sshrl.u32 %s1448, 1
    %s1450 = sor.u32 %s1448, %s1449
    %s1451 = sand.u32 51, %s1450
    %s1452 = sshrl.u32 %s1451, 2
    %s1453 = sor.u32 %s1451, %s1452
    %s1454 = sand.u32 15, %s1453
    %v1455 = vld [vmem:[%s1445] sm:%s1454]
    %v1456 = vunpack.c.l.bf16 %v1455
    %v1457 = vunpack.c.h.bf16 %v1455
    %v1458 = vlaneseq
    %v1459 = vand.u32 %v1458, 127
    %vm1461 = vcmp.lt.s32.totalorder %v1459, 96
    %v1462 = vsel %vm1461, %v1456, %v10
    %s1463 = scalar_lea.vmem [#allocation9], 248
    %v1464 = vpack.c.bf16 0.0, %v1462
    %s1466 = ssub.s32 16, 1
    %1467 = vst [vmem:[%s1463] sm:%s1466] %v1464
    %s1468 = scalar_lea.vmem %s2, 252
    %s1470 = sor.u32 255, 127
    %s1471 = sand.u32 %s1470, 85
    %s1472 = sshrl.u32 %s1471, 1
    %s1473 = sor.u32 %s1471, %s1472
    %s1474 = sand.u32 51, %s1473
    %s1475 = sshrl.u32 %s1474, 2
    %s1476 = sor.u32 %s1474, %s1475
    %s1477 = sand.u32 15, %s1476
    %v1478 = vld [vmem:[%s1468] sm:%s1477]
    %v1479 = vunpack.c.l.bf16 %v1478
    %v1480 = vunpack.c.h.bf16 %v1478
    %v1481 = vlaneseq
    %v1482 = vand.u32 %v1481, 127
    %vm1484 = vcmp.lt.s32.totalorder %v1482, 96
    %v1485 = vsel %vm1484, %v1479, %v10
    %s1486 = scalar_lea.vmem [#allocation9], 252
    %v1487 = vpack.c.bf16 0.0, %v1485
    %s1489 = ssub.s32 16, 1
    %1490 = vst [vmem:[%s1486] sm:%s1489] %v1487
    %v1492 = vld [vmem:[#allocation9] sm:$0xf]
    %v1493 = vld [vmem:[#allocation9 + $0x4] sm:$0xf]
    %v1494 = vld [vmem:[#allocation9 + $0x8] sm:$0xf]
    %v1495 = vld [vmem:[#allocation9 + $0xc] sm:$0xf]
    %v1496 = vld [vmem:[#allocation9 + $0x10] sm:$0xf]
    %v1497 = vld [vmem:[#allocation9 + $0x14] sm:$0xf]
    %v1498 = vld [vmem:[#allocation9 + $0x18] sm:$0xf]
    %v1499 = vld [vmem:[#allocation9 + $0x1c] sm:$0xf]
    %v1500 = vld [vmem:[#allocation9 + $0x20] sm:$0xf]
    %v1501 = vld [vmem:[#allocation9 + $0x24] sm:$0xf]
    %v1502 = vld [vmem:[#allocation9 + $0x28] sm:$0xf]
    %v1503 = vld [vmem:[#allocation9 + $0x2c] sm:$0xf]
    %v1504 = vld [vmem:[#allocation9 + $0x30] sm:$0xf]
    %v1505 = vld [vmem:[#allocation9 + $0x34] sm:$0xf]
    %v1506 = vld [vmem:[#allocation9 + $0x38] sm:$0xf]
    %v1507 = vld [vmem:[#allocation9 + $0x3c] sm:$0xf]
    %v1508 = vld [vmem:[#allocation9 + $0x40] sm:$0xf]
    %v1509 = vld [vmem:[#allocation9 + $0x44] sm:$0xf]
    %v1510 = vld [vmem:[#allocation9 + $0x48] sm:$0xf]
    %v1511 = vld [vmem:[#allocation9 + $0x4c] sm:$0xf]
    %v1512 = vld [vmem:[#allocation9 + $0x50] sm:$0xf]
    %v1513 = vld [vmem:[#allocation9 + $0x54] sm:$0xf]
    %v1514 = vld [vmem:[#allocation9 + $0x58] sm:$0xf]
    %v1515 = vld [vmem:[#allocation9 + $0x5c] sm:$0xf]
    %v1516 = vld [vmem:[#allocation9 + $0x60] sm:$0xf]
    %v1517 = vld [vmem:[#allocation9 + $0x64] sm:$0xf]
    %v1518 = vld [vmem:[#allocation9 + $0x68] sm:$0xf]
    %v1519 = vld [vmem:[#allocation9 + $0x6c] sm:$0xf]
    %v1520 = vld [vmem:[#allocation9 + $0x70] sm:$0xf]
    %v1521 = vld [vmem:[#allocation9 + $0x74] sm:$0xf]
    %v1522 = vld [vmem:[#allocation9 + $0x78] sm:$0xf]
    %v1523 = vld [vmem:[#allocation9 + $0x7c] sm:$0xf]
    %v1524 = vld [vmem:[#allocation9 + $0x80] sm:$0xf]
    %v1525 = vld [vmem:[#allocation9 + $0x84] sm:$0xf]
    %v1526 = vld [vmem:[#allocation9 + $0x88] sm:$0xf]
    %v1527 = vld [vmem:[#allocation9 + $0x8c] sm:$0xf]
    %v1528 = vld [vmem:[#allocation9 + $0x90] sm:$0xf]
    %v1529 = vld [vmem:[#allocation9 + $0x94] sm:$0xf]
    %v1530 = vld [vmem:[#allocation9 + $0x98] sm:$0xf]
    %v1531 = vld [vmem:[#allocation9 + $0x9c] sm:$0xf]
    %v1532 = vld [vmem:[#allocation9 + $0xa0] sm:$0xf]
    %v1533 = vld [vmem:[#allocation9 + $0xa4] sm:$0xf]
    %v1534 = vld [vmem:[#allocation9 + $0xa8] sm:$0xf]
    %v1535 = vld [vmem:[#allocation9 + $0xac] sm:$0xf]
    %v1536 = vld [vmem:[#allocation9 + $0xb0] sm:$0xf]
    %v1537 = vld [vmem:[#allocation9 + $0xb4] sm:$0xf]
    %v1538 = vld [vmem:[#allocation9 + $0xb8] sm:$0xf]
    %v1539 = vld [vmem:[#allocation9 + $0xbc] sm:$0xf]
    %v1540 = vld [vmem:[#allocation9 + $0xc0] sm:$0xf]
    %v1541 = vld [vmem:[#allocation9 + $0xc4] sm:$0xf]
    %v1542 = vld [vmem:[#allocation9 + $0xc8] sm:$0xf]
    %v1543 = vld [vmem:[#allocation9 + $0xcc] sm:$0xf]
    %v1544 = vld [vmem:[#allocation9 + $0xd0] sm:$0xf]
    %v1545 = vld [vmem:[#allocation9 + $0xd4] sm:$0xf]
    %v1546 = vld [vmem:[#allocation9 + $0xd8] sm:$0xf]
    %v1547 = vld [vmem:[#allocation9 + $0xdc] sm:$0xf]
    %v1548 = vld [vmem:[#allocation9 + $0xe0] sm:$0xf]
    %v1549 = vld [vmem:[#allocation9 + $0xe4] sm:$0xf]
    %v1550 = vld [vmem:[#allocation9 + $0xe8] sm:$0xf]
    %v1551 = vld [vmem:[#allocation9 + $0xec] sm:$0xf]
    %v1552 = vld [vmem:[#allocation9 + $0xf0] sm:$0xf]
    %v1553 = vld [vmem:[#allocation9 + $0xf4] sm:$0xf]
    %v1554 = vld [vmem:[#allocation9 + $0xf8] sm:$0xf]
    %v1555 = vld [vmem:[#allocation9 + $0xfc] sm:$0xf]
    %v1556 = vld [vmem:[%s0] sm:$0xf]
    %v1557 = vld [vmem:[%s0 + $0x4] sm:$0xf]
    %v1558 = vld [vmem:[%s0 + $0x8] sm:$0xf]
    %v1559 = vld [vmem:[%s0 + $0xc] sm:$0xf]
    %v1560 = vld [vmem:[%s0 + $0x10] sm:$0xf]
    %v1561 = vld [vmem:[%s0 + $0x14] sm:$0xf]
    %v1562 = vld [vmem:[%s0 + $0x18] sm:$0xf]
    %v1563 = vld [vmem:[%s0 + $0x1c] sm:$0xf]
    %v1564 = vld [vmem:[%s0 + $0x20] sm:$0xf]
    %v1565 = vld [vmem:[%s0 + $0x24] sm:$0xf]
    %v1566 = vld [vmem:[%s0 + $0x28] sm:$0xf]
    %v1567 = vld [vmem:[%s0 + $0x2c] sm:$0xf]
    %v1568 = vld [vmem:[%s0 + $0x30] sm:$0xf]
    %v1569 = vld [vmem:[%s0 + $0x34] sm:$0xf]
    %v1570 = vld [vmem:[%s0 + $0x38] sm:$0xf]
    %v1571 = vld [vmem:[%s0 + $0x3c] sm:$0xf]
    %v1572 = vld [vmem:[%s1] sm:$0x1]
    %v1574 = vlaneseq
    %v1575 = vshrl.u32 %v1574, 7
    %v1576 = vsub.s32 0, %v1575
    %v1577 = vrot.slane %v1572, %v1576
    %v1643 = vunpack.c.l.b16 %v1492
    %v1644 = vunpack.c.l.b16 %v1493
    %v1645 = vunpack.c.l.b16 %v1494
    %v1646 = vunpack.c.l.b16 %v1495
    %v1647 = vunpack.c.l.b16 %v1496
    %v1648 = vunpack.c.l.b16 %v1497
    %v1649 = vunpack.c.l.b16 %v1498
    %v1650 = vunpack.c.l.b16 %v1499
    %v1651 = vunpack.c.l.b16 %v1500
    %v1652 = vunpack.c.l.b16 %v1501
    %v1653 = vunpack.c.l.b16 %v1502
    %v1654 = vunpack.c.l.b16 %v1503
    %v1655 = vunpack.c.l.b16 %v1504
    %v1656 = vunpack.c.l.b16 %v1505
    %v1657 = vunpack.c.l.b16 %v1506
    %v1658 = vunpack.c.l.b16 %v1507
    %v1659 = vunpack.c.l.b16 %v1508
    %v1660 = vunpack.c.l.b16 %v1509
    %v1661 = vunpack.c.l.b16 %v1510
    %v1662 = vunpack.c.l.b16 %v1511
    %v1663 = vunpack.c.l.b16 %v1512
    %v1664 = vunpack.c.l.b16 %v1513
    %v1665 = vunpack.c.l.b16 %v1514
    %v1666 = vunpack.c.l.b16 %v1515
    %v1667 = vunpack.c.l.b16 %v1516
    %v1668 = vunpack.c.l.b16 %v1517
    %v1669 = vunpack.c.l.b16 %v1518
    %v1670 = vunpack.c.l.b16 %v1519
    %v1671 = vunpack.c.l.b16 %v1520
    %v1672 = vunpack.c.l.b16 %v1521
    %v1673 = vunpack.c.l.b16 %v1522
    %v1674 = vunpack.c.l.b16 %v1523
    %v1675 = vunpack.c.l.b16 %v1524
    %v1676 = vunpack.c.l.b16 %v1525
    %v1677 = vunpack.c.l.b16 %v1526
    %v1678 = vunpack.c.l.b16 %v1527
    %v1679 = vunpack.c.l.b16 %v1528
    %v1680 = vunpack.c.l.b16 %v1529
    %v1681 = vunpack.c.l.b16 %v1530
    %v1682 = vunpack.c.l.b16 %v1531
    %v1683 = vunpack.c.l.b16 %v1532
    %v1684 = vunpack.c.l.b16 %v1533
    %v1685 = vunpack.c.l.b16 %v1534
    %v1686 = vunpack.c.l.b16 %v1535
    %v1687 = vunpack.c.l.b16 %v1536
    %v1688 = vunpack.c.l.b16 %v1537
    %v1689 = vunpack.c.l.b16 %v1538
    %v1690 = vunpack.c.l.b16 %v1539
    %v1691 = vunpack.c.l.b16 %v1540
    %v1692 = vunpack.c.l.b16 %v1541
    %v1693 = vunpack.c.l.b16 %v1542
    %v1694 = vunpack.c.l.b16 %v1543
    %v1695 = vunpack.c.l.b16 %v1544
    %v1696 = vunpack.c.l.b16 %v1545
    %v1697 = vunpack.c.l.b16 %v1546
    %v1698 = vunpack.c.l.b16 %v1547
    %v1699 = vunpack.c.l.b16 %v1548
    %v1700 = vunpack.c.l.b16 %v1549
    %v1701 = vunpack.c.l.b16 %v1550
    %v1702 = vunpack.c.l.b16 %v1551
    %v1703 = vunpack.c.l.b16 %v1552
    %v1704 = vunpack.c.l.b16 %v1553
    %v1705 = vunpack.c.l.b16 %v1554
    %v1706 = vunpack.c.l.b16 %v1555
    %v1707 = vpack.c.b16 %v1644, %v1643
    %v1708 = vpack.c.b16 %v1646, %v1645
    %v1709 = vpack.c.b16 %v1648, %v1647
    %v1710 = vpack.c.b16 %v1650, %v1649
    %v1711 = vpack.c.b16 %v1652, %v1651
    %v1712 = vpack.c.b16 %v1654, %v1653
    %v1713 = vpack.c.b16 %v1656, %v1655
    %v1714 = vpack.c.b16 %v1658, %v1657
    %v1715 = vpack.c.b16 %v1660, %v1659
    %v1716 = vpack.c.b16 %v1662, %v1661
    %v1717 = vpack.c.b16 %v1664, %v1663
    %v1718 = vpack.c.b16 %v1666, %v1665
    %v1719 = vpack.c.b16 %v1668, %v1667
    %v1720 = vpack.c.b16 %v1670, %v1669
    %v1721 = vpack.c.b16 %v1672, %v1671
    %v1722 = vpack.c.b16 %v1674, %v1673
    %v1723 = vpack.c.b16 %v1676, %v1675
    %v1724 = vpack.c.b16 %v1678, %v1677
    %v1725 = vpack.c.b16 %v1680, %v1679
    %v1726 = vpack.c.b16 %v1682, %v1681
    %v1727 = vpack.c.b16 %v1684, %v1683
    %v1728 = vpack.c.b16 %v1686, %v1685
    %v1729 = vpack.c.b16 %v1688, %v1687
    %v1730 = vpack.c.b16 %v1690, %v1689
    %v1731 = vpack.c.b16 %v1692, %v1691
    %v1732 = vpack.c.b16 %v1694, %v1693
    %v1733 = vpack.c.b16 %v1696, %v1695
    %v1734 = vpack.c.b16 %v1698, %v1697
    %v1735 = vpack.c.b16 %v1700, %v1699
    %v1736 = vpack.c.b16 %v1702, %v1701
    %v1737 = vpack.c.b16 %v1704, %v1703
    %v1738 = vpack.c.b16 %v1706, %v1705
    %v1787 = vunpack.c.l.b16 %v1556
    %v1788 = vunpack.c.l.b16 %v1557
    %v1789 = vunpack.c.l.b16 %v1558
    %v1790 = vunpack.c.l.b16 %v1559
    %v1791 = vunpack.c.l.b16 %v1560
    %v1792 = vunpack.c.l.b16 %v1561
    %v1793 = vunpack.c.l.b16 %v1562
    %v1794 = vunpack.c.l.b16 %v1563
    %v1795 = vunpack.c.l.b16 %v1564
    %v1796 = vunpack.c.l.b16 %v1565
    %v1797 = vunpack.c.l.b16 %v1566
    %v1798 = vunpack.c.l.b16 %v1567
    %v1799 = vunpack.c.l.b16 %v1568
    %v1800 = vunpack.c.l.b16 %v1569
    %v1801 = vunpack.c.l.b16 %v1570
    %v1802 = vunpack.c.l.b16 %v1571
    %v1803 = vpack.c.b16 %v1788, %v1787
    %v1804 = vpack.c.b16 %v1790, %v1789
    %v1805 = vpack.c.b16 %v1792, %v1791
    %v1806 = vpack.c.b16 %v1794, %v1793
    %v1807 = vpack.c.b16 %v1796, %v1795
    %v1808 = vpack.c.b16 %v1798, %v1797
    %v1809 = vpack.c.b16 %v1800, %v1799
    %v1810 = vpack.c.b16 %v1802, %v1801
    %1819 = vmatprep.subr.bf16.mxu0 0
    %1820 = vmatpush1.bf16.msra.mxu0 %v1810
    %1821 = vmatprep.subr.bf16.mxu0 0
    %1822 = vmatpush1.bf16.msra.mxu0 %v1809
    %1823 = vmatprep.subr.bf16.mxu0 0
    %1824 = vmatpush1.bf16.msra.mxu0 %v1808
    %1825 = vmatprep.subr.bf16.mxu0 0
    %1826 = vmatpush1.bf16.msra.mxu0 %v1807
    %1827 = vmatprep.subr.bf16.mxu0 0
    %1828 = vmatpush1.bf16.msra.mxu0 %v1806
    %1829 = vmatprep.subr.bf16.mxu0 0
    %1830 = vmatpush1.bf16.msra.mxu0 %v1805
    %1831 = vmatprep.subr.bf16.mxu0 0
    %1832 = vmatpush1.bf16.msra.mxu0 %v1804
    %1833 = vmatprep.subr.bf16.mxu0 0
    %1834 = vmatpush1.bf16.msra.mxu0 %v1803
    %1835 = vmatprep.subr.bf16.mxu0 0
    %1836 = vmatpush2.bf16.msra.mxu0 0
    %1837 = vmatprep.subr.bf16.mxu0 0
    %1838 = vmatpush2.bf16.msra.mxu0 0
    %1839 = vmatprep.subr.bf16.mxu0 0
    %1840 = vmatpush2.bf16.msra.mxu0 0
    %1841 = vmatprep.subr.bf16.mxu0 0
    %1842 = vmatpush2.bf16.msra.mxu0 0
    %1843 = vmatprep.subr.bf16.mxu0 0
    %1844 = vmatpush2.bf16.msra.mxu0 0
    %1845 = vmatprep.subr.bf16.mxu0 0
    %1846 = vmatpush2.bf16.msra.mxu0 0
    %1847 = vmatprep.subr.bf16.mxu0 0
    %1848 = vmatpush2.bf16.msra.mxu0 0
    %1849 = vmatprep.subr.bf16.mxu0 0
    %1850 = vmatpush2.bf16.msra.mxu0 0
    %1851 = vmatprep.mubr.bf16.mxu0 0
    %1852 = vmatmul.mubr.bf16.gmra.mxu0 %v1707
    %v1853 = vpop.f32.mrf.mxu0
    %v1854 = vadd.f32 %v1577, %v1853
    %v1855 = vpop.f32.mrf.mxu0
    %v1856 = vpop.f32.mrf.mxu0
    %v1857 = vadd.f32 %v1577, %v1856
    %v1858 = vpop.f32.mrf.mxu0
    %1859 = vmatprep.mubr.bf16.mxu0 0
    %1860 = vmatmul.mubr.bf16.gmra.mxu0 %v1708
    %v1861 = vpop.f32.mrf.mxu0
    %v1862 = vadd.f32 %v1577, %v1861
    %v1863 = vpop.f32.mrf.mxu0
    %v1864 = vpop.f32.mrf.mxu0
    %v1865 = vadd.f32 %v1577, %v1864
    %v1866 = vpop.f32.mrf.mxu0
    %1867 = vmatprep.mubr.bf16.mxu0 0
    %1868 = vmatmul.mubr.bf16.gmra.mxu0 %v1709
    %v1869 = vpop.f32.mrf.mxu0
    %v1870 = vadd.f32 %v1577, %v1869
    %v1871 = vpop.f32.mrf.mxu0
    %v1872 = vpop.f32.mrf.mxu0
    %v1873 = vadd.f32 %v1577, %v1872
    %v1874 = vpop.f32.mrf.mxu0
    %1875 = vmatprep.mubr.bf16.mxu0 0
    %1876 = vmatmul.mubr.bf16.gmra.mxu0 %v1710
    %v1877 = vpop.f32.mrf.mxu0
    %v1878 = vadd.f32 %v1577, %v1877
    %v1879 = vpop.f32.mrf.mxu0
    %v1880 = vpop.f32.mrf.mxu0
    %v1881 = vadd.f32 %v1577, %v1880
    %v1882 = vpop.f32.mrf.mxu0
    %1883 = vmatprep.mubr.bf16.mxu0 0
    %1884 = vmatmul.mubr.bf16.gmra.mxu0 %v1711
    %v1885 = vpop.f32.mrf.mxu0
    %v1886 = vadd.f32 %v1577, %v1885
    %v1887 = vpop.f32.mrf.mxu0
    %v1888 = vpop.f32.mrf.mxu0
    %v1889 = vadd.f32 %v1577, %v1888
    %v1890 = vpop.f32.mrf.mxu0
    %1891 = vmatprep.mubr.bf16.mxu0 0
    %1892 = vmatmul.mubr.bf16.gmra.mxu0 %v1712
    %v1893 = vpop.f32.mrf.mxu0
    %v1894 = vadd.f32 %v1577, %v1893
    %v1895 = vpop.f32.mrf.mxu0
    %v1896 = vpop.f32.mrf.mxu0
    %v1897 = vadd.f32 %v1577, %v1896
    %v1898 = vpop.f32.mrf.mxu0
    %1899 = vmatprep.mubr.bf16.mxu0 0
    %1900 = vmatmul.mubr.bf16.gmra.mxu0 %v1713
    %v1901 = vpop.f32.mrf.mxu0
    %v1902 = vadd.f32 %v1577, %v1901
    %v1903 = vpop.f32.mrf.mxu0
    %v1904 = vpop.f32.mrf.mxu0
    %v1905 = vadd.f32 %v1577, %v1904
    %v1906 = vpop.f32.mrf.mxu0
    %1907 = vmatprep.mubr.bf16.mxu0 0
    %1908 = vmatmul.mubr.bf16.gmra.mxu0 %v1714
    %v1909 = vpop.f32.mrf.mxu0
    %v1910 = vadd.f32 %v1577, %v1909
    %v1911 = vpop.f32.mrf.mxu0
    %v1912 = vpop.f32.mrf.mxu0
    %v1913 = vadd.f32 %v1577, %v1912
    %v1914 = vpop.f32.mrf.mxu0
    %1915 = vmatprep.mubr.bf16.mxu0 0
    %1916 = vmatmul.mubr.bf16.gmra.mxu0 %v1715
    %v1917 = vpop.f32.mrf.mxu0
    %v1918 = vadd.f32 %v1577, %v1917
    %v1919 = vpop.f32.mrf.mxu0
    %v1920 = vpop.f32.mrf.mxu0
    %v1921 = vadd.f32 %v1577, %v1920
    %v1922 = vpop.f32.mrf.mxu0
    %1923 = vmatprep.mubr.bf16.mxu0 0
    %1924 = vmatmul.mubr.bf16.gmra.mxu0 %v1716
    %v1925 = vpop.f32.mrf.mxu0
    %v1926 = vadd.f32 %v1577, %v1925
    %v1927 = vpop.f32.mrf.mxu0
    %v1928 = vpop.f32.mrf.mxu0
    %v1929 = vadd.f32 %v1577, %v1928
    %v1930 = vpop.f32.mrf.mxu0
    %1931 = vmatprep.mubr.bf16.mxu0 0
    %1932 = vmatmul.mubr.bf16.gmra.mxu0 %v1717
    %v1933 = vpop.f32.mrf.mxu0
    %v1934 = vadd.f32 %v1577, %v1933
    %v1935 = vpop.f32.mrf.mxu0
    %v1936 = vpop.f32.mrf.mxu0
    %v1937 = vadd.f32 %v1577, %v1936
    %v1938 = vpop.f32.mrf.mxu0
    %1939 = vmatprep.mubr.bf16.mxu0 0
    %1940 = vmatmul.mubr.bf16.gmra.mxu0 %v1718
    %v1941 = vpop.f32.mrf.mxu0
    %v1942 = vadd.f32 %v1577, %v1941
    %v1943 = vpop.f32.mrf.mxu0
    %v1944 = vpop.f32.mrf.mxu0
    %v1945 = vadd.f32 %v1577, %v1944
    %v1946 = vpop.f32.mrf.mxu0
    %1947 = vmatprep.mubr.bf16.mxu0 0
    %1948 = vmatmul.mubr.bf16.gmra.mxu0 %v1719
    %v1949 = vpop.f32.mrf.mxu0
    %v1950 = vadd.f32 %v1577, %v1949
    %v1951 = vpop.f32.mrf.mxu0
    %v1952 = vpop.f32.mrf.mxu0
    %v1953 = vadd.f32 %v1577, %v1952
    %v1954 = vpop.f32.mrf.mxu0
    %1955 = vmatprep.mubr.bf16.mxu0 0
    %1956 = vmatmul.mubr.bf16.gmra.mxu0 %v1720
    %v1957 = vpop.f32.mrf.mxu0
    %v1958 = vadd.f32 %v1577, %v1957
    %v1959 = vpop.f32.mrf.mxu0
    %v1960 = vpop.f32.mrf.mxu0
    %v1961 = vadd.f32 %v1577, %v1960
    %v1962 = vpop.f32.mrf.mxu0
    %1963 = vmatprep.mubr.bf16.mxu0 0
    %1964 = vmatmul.mubr.bf16.gmra.mxu0 %v1721
    %v1965 = vpop.f32.mrf.mxu0
    %v1966 = vadd.f32 %v1577, %v1965
    %v1967 = vpop.f32.mrf.mxu0
    %v1968 = vpop.f32.mrf.mxu0
    %v1969 = vadd.f32 %v1577, %v1968
    %v1970 = vpop.f32.mrf.mxu0
    %1971 = vmatprep.mubr.bf16.mxu0 0
    %1972 = vmatmul.mubr.bf16.gmra.mxu0 %v1722
    %v1973 = vpop.f32.mrf.mxu0
    %v1974 = vadd.f32 %v1577, %v1973
    %v1975 = vpop.f32.mrf.mxu0
    %v1976 = vpop.f32.mrf.mxu0
    %v1977 = vadd.f32 %v1577, %v1976
    %v1978 = vpop.f32.mrf.mxu0
    %1979 = vmatprep.mubr.bf16.mxu0 0
    %1980 = vmatmul.mubr.bf16.gmra.mxu0 %v1723
    %v1981 = vpop.f32.mrf.mxu0
    %v1982 = vadd.f32 %v1577, %v1981
    %v1983 = vpop.f32.mrf.mxu0
    %v1984 = vpop.f32.mrf.mxu0
    %v1985 = vadd.f32 %v1577, %v1984
    %v1986 = vpop.f32.mrf.mxu0
    %1987 = vmatprep.mubr.bf16.mxu0 0
    %1988 = vmatmul.mubr.bf16.gmra.mxu0 %v1724
    %v1989 = vpop.f32.mrf.mxu0
    %v1990 = vadd.f32 %v1577, %v1989
    %v1991 = vpop.f32.mrf.mxu0
    %v1992 = vpop.f32.mrf.mxu0
    %v1993 = vadd.f32 %v1577, %v1992
    %v1994 = vpop.f32.mrf.mxu0
    %1995 = vmatprep.mubr.bf16.mxu0 0
    %1996 = vmatmul.mubr.bf16.gmra.mxu0 %v1725
    %v1997 = vpop.f32.mrf.mxu0
    %v1998 = vadd.f32 %v1577, %v1997
    %v1999 = vpop.f32.mrf.mxu0
    %v2000 = vpop.f32.mrf.mxu0
    %v2001 = vadd.f32 %v1577, %v2000
    %v2002 = vpop.f32.mrf.mxu0
    %2003 = vmatprep.mubr.bf16.mxu0 0
    %2004 = vmatmul.mubr.bf16.gmra.mxu0 %v1726
    %v2005 = vpop.f32.mrf.mxu0
    %v2006 = vadd.f32 %v1577, %v2005
    %v2007 = vpop.f32.mrf.mxu0
    %v2008 = vpop.f32.mrf.mxu0
    %v2009 = vadd.f32 %v1577, %v2008
    %v2010 = vpop.f32.mrf.mxu0
    %2011 = vmatprep.mubr.bf16.mxu0 0
    %2012 = vmatmul.mubr.bf16.gmra.mxu0 %v1727
    %v2013 = vpop.f32.mrf.mxu0
    %v2014 = vadd.f32 %v1577, %v2013
    %v2015 = vpop.f32.mrf.mxu0
    %v2016 = vpop.f32.mrf.mxu0
    %v2017 = vadd.f32 %v1577, %v2016
    %v2018 = vpop.f32.mrf.mxu0
    %2019 = vmatprep.mubr.bf16.mxu0 0
    %2020 = vmatmul.mubr.bf16.gmra.mxu0 %v1728
    %v2021 = vpop.f32.mrf.mxu0
    %v2022 = vadd.f32 %v1577, %v2021
    %v2023 = vpop.f32.mrf.mxu0
    %v2024 = vpop.f32.mrf.mxu0
    %v2025 = vadd.f32 %v1577, %v2024
    %v2026 = vpop.f32.mrf.mxu0
    %2027 = vmatprep.mubr.bf16.mxu0 0
    %2028 = vmatmul.mubr.bf16.gmra.mxu0 %v1729
    %v2029 = vpop.f32.mrf.mxu0
    %v2030 = vadd.f32 %v1577, %v2029
    %v2031 = vpop.f32.mrf.mxu0
    %v2032 = vpop.f32.mrf.mxu0
    %v2033 = vadd.f32 %v1577, %v2032
    %v2034 = vpop.f32.mrf.mxu0
    %2035 = vmatprep.mubr.bf16.mxu0 0
    %2036 = vmatmul.mubr.bf16.gmra.mxu0 %v1730
    %v2037 = vpop.f32.mrf.mxu0
    %v2038 = vadd.f32 %v1577, %v2037
    %v2039 = vpop.f32.mrf.mxu0
    %v2040 = vpop.f32.mrf.mxu0
    %v2041 = vadd.f32 %v1577, %v2040
    %v2042 = vpop.f32.mrf.mxu0
    %2043 = vmatprep.mubr.bf16.mxu0 0
    %2044 = vmatmul.mubr.bf16.gmra.mxu0 %v1731
    %v2045 = vpop.f32.mrf.mxu0
    %v2046 = vadd.f32 %v1577, %v2045
    %v2047 = vpop.f32.mrf.mxu0
    %v2048 = vpop.f32.mrf.mxu0
    %v2049 = vadd.f32 %v1577, %v2048
    %v2050 = vpop.f32.mrf.mxu0
    %2051 = vmatprep.mubr.bf16.mxu0 0
    %2052 = vmatmul.mubr.bf16.gmra.mxu0 %v1732
    %v2053 = vpop.f32.mrf.mxu0
    %v2054 = vadd.f32 %v1577, %v2053
    %v2055 = vpop.f32.mrf.mxu0
    %v2056 = vpop.f32.mrf.mxu0
    %v2057 = vadd.f32 %v1577, %v2056
    %v2058 = vpop.f32.mrf.mxu0
    %2059 = vmatprep.mubr.bf16.mxu0 0
    %2060 = vmatmul.mubr.bf16.gmra.mxu0 %v1733
    %v2061 = vpop.f32.mrf.mxu0
    %v2062 = vadd.f32 %v1577, %v2061
    %v2063 = vpop.f32.mrf.mxu0
    %v2064 = vpop.f32.mrf.mxu0
    %v2065 = vadd.f32 %v1577, %v2064
    %v2066 = vpop.f32.mrf.mxu0
    %2067 = vmatprep.mubr.bf16.mxu0 0
    %2068 = vmatmul.mubr.bf16.gmra.mxu0 %v1734
    %v2069 = vpop.f32.mrf.mxu0
    %v2070 = vadd.f32 %v1577, %v2069
    %v2071 = vpop.f32.mrf.mxu0
    %v2072 = vpop.f32.mrf.mxu0
    %v2073 = vadd.f32 %v1577, %v2072
    %v2074 = vpop.f32.mrf.mxu0
    %2075 = vmatprep.mubr.bf16.mxu0 0
    %2076 = vmatmul.mubr.bf16.gmra.mxu0 %v1735
    %v2077 = vpop.f32.mrf.mxu0
    %v2078 = vadd.f32 %v1577, %v2077
    %v2079 = vpop.f32.mrf.mxu0
    %v2080 = vpop.f32.mrf.mxu0
    %v2081 = vadd.f32 %v1577, %v2080
    %v2082 = vpop.f32.mrf.mxu0
    %2083 = vmatprep.mubr.bf16.mxu0 0
    %2084 = vmatmul.mubr.bf16.gmra.mxu0 %v1736
    %v2085 = vpop.f32.mrf.mxu0
    %v2086 = vadd.f32 %v1577, %v2085
    %v2087 = vpop.f32.mrf.mxu0
    %v2088 = vpop.f32.mrf.mxu0
    %v2089 = vadd.f32 %v1577, %v2088
    %v2090 = vpop.f32.mrf.mxu0
    %2091 = vmatprep.mubr.bf16.mxu0 0
    %2092 = vmatmul.mubr.bf16.gmra.mxu0 %v1737
    %v2093 = vpop.f32.mrf.mxu0
    %v2094 = vadd.f32 %v1577, %v2093
    %v2095 = vpop.f32.mrf.mxu0
    %v2096 = vpop.f32.mrf.mxu0
    %v2097 = vadd.f32 %v1577, %v2096
    %v2098 = vpop.f32.mrf.mxu0
    %2099 = vmatprep.mubr.bf16.mxu0 0
    %2100 = vmatmul.mubr.bf16.gmra.mxu0 %v1738
    %v2101 = vpop.f32.mrf.mxu0
    %v2102 = vadd.f32 %v1577, %v2101
    %v2103 = vpop.f32.mrf.mxu0
    %v2104 = vpop.f32.mrf.mxu0
    %v2105 = vadd.f32 %v1577, %v2104
    %v2106 = vpop.f32.mrf.mxu0
    %2107 = vdwg.mxu0
    %2108 = vst [vmem:[#allocation7] sm:$0xff] %v1854
    %2109 = vst [vmem:[#allocation7 + $0x8] sm:$0xff] %v1857
    %2110 = vst [vmem:[#allocation7 + $0x10] sm:$0xff] %v1862
    %2111 = vst [vmem:[#allocation7 + $0x18] sm:$0xff] %v1865
    %2112 = vst [vmem:[#allocation7 + $0x20] sm:$0xff] %v1870
    %2113 = vst [vmem:[#allocation7 + $0x28] sm:$0xff] %v1873
    %2114 = vst [vmem:[#allocation7 + $0x30] sm:$0xff] %v1878
    %2115 = vst [vmem:[#allocation7 + $0x38] sm:$0xff] %v1881
    %2116 = vst [vmem:[#allocation7 + $0x40] sm:$0xff] %v1886
    %2117 = vst [vmem:[#allocation7 + $0x48] sm:$0xff] %v1889
    %2118 = vst [vmem:[#allocation7 + $0x50] sm:$0xff] %v1894
    %2119 = vst [vmem:[#allocation7 + $0x58] sm:$0xff] %v1897
    %2120 = vst [vmem:[#allocation7 + $0x60] sm:$0xff] %v1902
    %2121 = vst [vmem:[#allocation7 + $0x68] sm:$0xff] %v1905
    %2122 = vst [vmem:[#allocation7 + $0x70] sm:$0xff] %v1910
    %2123 = vst [vmem:[#allocation7 + $0x78] sm:$0xff] %v1913
    %2124 = vst [vmem:[#allocation7 + $0x80] sm:$0xff] %v1918
    %2125 = vst [vmem:[#allocation7 + $0x88] sm:$0xff] %v1921
    %2126 = vst [vmem:[#allocation7 + $0x90] sm:$0xff] %v1926
    %2127 = vst [vmem:[#allocation7 + $0x98] sm:$0xff] %v1929
    %2128 = vst [vmem:[#allocation7 + $0xa0] sm:$0xff] %v1934
    %2129 = vst [vmem:[#allocation7 + $0xa8] sm:$0xff] %v1937
    %2130 = vst [vmem:[#allocation7 + $0xb0] sm:$0xff] %v1942
    %2131 = vst [vmem:[#allocation7 + $0xb8] sm:$0xff] %v1945
    %2132 = vst [vmem:[#allocation7 + $0xc0] sm:$0xff] %v1950
    %2133 = vst [vmem:[#allocation7 + $0xc8] sm:$0xff] %v1953
    %2134 = vst [vmem:[#allocation7 + $0xd0] sm:$0xff] %v1958
    %2135 = vst [vmem:[#allocation7 + $0xd8] sm:$0xff] %v1961
    %2136 = vst [vmem:[#allocation7 + $0xe0] sm:$0xff] %v1966
    %2137 = vst [vmem:[#allocation7 + $0xe8] sm:$0xff] %v1969
    %2138 = vst [vmem:[#allocation7 + $0xf0] sm:$0xff] %v1974
    %2139 = vst [vmem:[#allocation7 + $0xf8] sm:$0xff] %v1977
    %2140 = vst [vmem:[#allocation7 + $0x100] sm:$0xff] %v1982
    %2141 = vst [vmem:[#allocation7 + $0x108] sm:$0xff] %v1985
    %2142 = vst [vmem:[#allocation7 + $0x110] sm:$0xff] %v1990
    %2143 = vst [vmem:[#allocation7 + $0x118] sm:$0xff] %v1993
    %2144 = vst [vmem:[#allocation7 + $0x120] sm:$0xff] %v1998
    %2145 = vst [vmem:[#allocation7 + $0x128] sm:$0xff] %v2001
    %2146 = vst [vmem:[#allocation7 + $0x130] sm:$0xff] %v2006
    %2147 = vst [vmem:[#allocation7 + $0x138] sm:$0xff] %v2009
    %2148 = vst [vmem:[#allocation7 + $0x140] sm:$0xff] %v2014
    %2149 = vst [vmem:[#allocation7 + $0x148] sm:$0xff] %v2017
    %2150 = vst [vmem:[#allocation7 + $0x150] sm:$0xff] %v2022
    %2151 = vst [vmem:[#allocation7 + $0x158] sm:$0xff] %v2025
    %2152 = vst [vmem:[#allocation7 + $0x160] sm:$0xff] %v2030
    %2153 = vst [vmem:[#allocation7 + $0x168] sm:$0xff] %v2033
    %2154 = vst [vmem:[#allocation7 + $0x170] sm:$0xff] %v2038
    %2155 = vst [vmem:[#allocation7 + $0x178] sm:$0xff] %v2041
    %2156 = vst [vmem:[#allocation7 + $0x180] sm:$0xff] %v2046
    %2157 = vst [vmem:[#allocation7 + $0x188] sm:$0xff] %v2049
    %2158 = vst [vmem:[#allocation7 + $0x190] sm:$0xff] %v2054
    %2159 = vst [vmem:[#allocation7 + $0x198] sm:$0xff] %v2057
    %2160 = vst [vmem:[#allocation7 + $0x1a0] sm:$0xff] %v2062
    %2161 = vst [vmem:[#allocation7 + $0x1a8] sm:$0xff] %v2065
    %2162 = vst [vmem:[#allocation7 + $0x1b0] sm:$0xff] %v2070
    %2163 = vst [vmem:[#allocation7 + $0x1b8] sm:$0xff] %v2073
    %2164 = vst [vmem:[#allocation7 + $0x1c0] sm:$0xff] %v2078
    %2165 = vst [vmem:[#allocation7 + $0x1c8] sm:$0xff] %v2081
    %2166 = vst [vmem:[#allocation7 + $0x1d0] sm:$0xff] %v2086
    %2167 = vst [vmem:[#allocation7 + $0x1d8] sm:$0xff] %v2089
    %2168 = vst [vmem:[#allocation7 + $0x1e0] sm:$0xff] %v2094
    %2169 = vst [vmem:[#allocation7 + $0x1e8] sm:$0xff] %v2097
    %2170 = vst [vmem:[#allocation7 + $0x1f0] sm:$0xff] %v2102
    %2171 = vst [vmem:[#allocation7 + $0x1f8] sm:$0xff] %v2105
    // Predicated region
    $region14: #{a_call__.2} parent=1 // pred_check
      _
    $region15: #{a_call__.2} parent=1 // pred_check_branch
      %2173 = sbr.rel (0) target = $region17
    $region16: #{a_call__.2} parent=1 // pred_region
      %s2175 = ssub.s32 8192, 8192
      %2176 = vsyncadd [#allocation8], %s2175
      %s2177 = sshll.u32 [#allocation7], 4
      %s2178 = int_to_ptr.vmem [resolvable:$true] %s2177
      %2183 = dma.vmem_to_hbm [thread:$0]  %s2178, 8192, %s4, [#allocation8], 128, 128, 8
    $region17: #{a_call__.2} parent=1 // pred_fallthru
      _
    // Predicated region
    $region18: #{a_call__.2} parent=1 // pred_check
      _
    $region19: #{a_call__.2} parent=1 // pred_check_branch
      %2185 = sbr.rel (0) target = $region21
    $region20: #{a_call__.2} parent=1 // pred_region
      %2186 = dma.done [#allocation8], 8192
    $region21: #{a_call__.2} parent=1 // pred_fallthru
      _
    %2187 = vsyncpa [#allocation8], 1

</llo_original>
